<compile_context>
chip_gen: v7x
topology: tpu7x:2x2x1
jax: 0.10.0
libtpu: 0.0.40
codegen_flags: <defaults>
</compile_context>

<pallas_src>
import functools

import jax
import jax.numpy as jnp
from jax.experimental import pallas as pl
from jax.experimental.pallas import tpu as pltpu

STACK_SIZE = 4
BN_EPS = 1e-5

_VMEM_SPEC = pl.BlockSpec(memory_space=pltpu.MemorySpace.VMEM)


# ----------------------------------------------------------------------------
# Pallas kernels
# ----------------------------------------------------------------------------
def conv_bn_relu_kernel(x_ref, w_ref, gamma_ref, beta_ref, o_ref, *, inv_m):
    """Fused im2col-GEMM + BatchNorm (batch stats, f32) + ReLU.

    x_ref:     (M, K)  bf16 patches, M = N*OH*OW, K = KH*KW*C (NHWC order)
    w_ref:     (K, OC) bf16 conv weight (pre-reshaped at init)
    gamma_ref: (1, OC) f32 BN weight
    beta_ref:  (1, OC) f32 BN bias
    o_ref:     (M, OC) bf16
    """
    acc = jnp.dot(x_ref[...], w_ref[...], preferred_element_type=jnp.float32)
    # single-traversal batch statistics (biased variance, matches train-mode BN)
    mean = jnp.sum(acc, axis=0, keepdims=True) * inv_m
    var = jnp.maximum(jnp.sum(acc * acc, axis=0, keepdims=True) * inv_m - mean * mean, 0.0)
    scale = gamma_ref[...] * jax.lax.rsqrt(var + BN_EPS)
    shift = beta_ref[...] - mean * scale
    o_ref[...] = jnp.maximum(acc * scale + shift, 0.0).astype(o_ref.dtype)


def tail_kernel(x_ref, w3_ref, g3_ref, b3_ref, fcw_ref, fcb_ref, hw_ref, hb_ref,
                o_ref, *, inv_m):
    """Fused conv3-GEMM + BN3 + ReLU + flatten + fc + ReLU + head.

    Valid when conv3's output is 1x1 spatial, so its im2col patch per sample is the
    whole conv2 feature map and flatten is the identity on the (N, 64) activation.

    x_ref:   (N, K3)     bf16   (K3 = 3*3*64, NHWC order)
    w3_ref:  (K3, 64)    bf16
    g3/b3:   (1, 64)     f32
    fcw_ref: (64, 512)   bf16   fcb_ref: (1, 512) f32
    hw_ref:  (512, OUT)  bf16   hb_ref:  (1, OUT) f32
    o_ref:   (N, OUT)    f32
    """
    a3 = jnp.dot(x_ref[...], w3_ref[...], preferred_element_type=jnp.float32)
    mean = jnp.sum(a3, axis=0, keepdims=True) * inv_m
    var = jnp.maximum(jnp.sum(a3 * a3, axis=0, keepdims=True) * inv_m - mean * mean, 0.0)
    scale = g3_ref[...] * jax.lax.rsqrt(var + BN_EPS)
    shift = b3_ref[...] - mean * scale
    h = jnp.maximum(a3 * scale + shift, 0.0)

    h = jnp.dot(h.astype(fcw_ref.dtype), fcw_ref[...],
                preferred_element_type=jnp.float32) + fcb_ref[...]
    h = jnp.maximum(h, 0.0)
    o_ref[...] = (jnp.dot(h.astype(hw_ref.dtype), hw_ref[...],
                          preferred_element_type=jnp.float32) + hb_ref[...]
                  ).astype(o_ref.dtype)


def fc_head_kernel(x_ref, fcw_ref, fcb_ref, hw_ref, hb_ref, o_ref):
    """Fused fc + ReLU + head (general-spatial fallback path)."""
    h = jnp.dot(x_ref[...], fcw_ref[...], preferred_element_type=jnp.float32) + fcb_ref[...]
    h = jnp.maximum(h, 0.0)
    o_ref[...] = (jnp.dot(h.astype(hw_ref.dtype), hw_ref[...],
                          preferred_element_type=jnp.float32) + hb_ref[...]
                  ).astype(o_ref.dtype)


# ----------------------------------------------------------------------------
# pallas_call wrappers
# ----------------------------------------------------------------------------
def _conv_call(patches, w_mat, gamma, beta):
    m = patches.shape[0]
    oc = w_mat.shape[1]
    return pl.pallas_call(
        functools.partial(conv_bn_relu_kernel, inv_m=1.0 / m),
        out_shape=jax.ShapeDtypeStruct((m, oc), jnp.bfloat16),
        in_specs=[_VMEM_SPEC] * 4,
        out_specs=_VMEM_SPEC,
    )(patches, w_mat, gamma, beta)


def _tail_call(x3, w3, g3, b3, fcw, fcb, hw, hb):
    n = x3.shape[0]
    nout = hw.shape[1]
    return pl.pallas_call(
        functools.partial(tail_kernel, inv_m=1.0 / n),
        out_shape=jax.ShapeDtypeStruct((n, nout), jnp.float32),
        in_specs=[_VMEM_SPEC] * 8,
        out_specs=_VMEM_SPEC,
    )(x3, w3, g3, b3, fcw, fcb, hw, hb)


def _fc_head_call(xf, fcw, fcb, hw, hb):
    n = xf.shape[0]
    nout = hw.shape[1]
    return pl.pallas_call(
        fc_head_kernel,
        out_shape=jax.ShapeDtypeStruct((n, nout), jnp.float32),
        in_specs=[_VMEM_SPEC] * 5,
        out_specs=_VMEM_SPEC,
    )(xf, fcw, fcb, hw, hb)


# ----------------------------------------------------------------------------
# Glue: NHWC im2col patch extraction (pure layout work, stays in JAX)
# ----------------------------------------------------------------------------
def im2col_nhwc(x, kh, kw, stride):
    """x: (N, H, W, C) -> (N*OH*OW, KH*KW*C), K ordered as (KH, KW, C)."""
    n, h, w, c = x.shape
    oh = (h - kh) // stride + 1
    ow = (w - kw) // stride + 1
    cols = [x[:, i:i + stride * oh:stride, j:j + stride * ow:stride, :]
            for i in range(kh) for j in range(kw)]
    cols = jnp.concatenate(cols, axis=-1)               # (N, OH, OW, KH*KW*C)
    return cols.reshape(n * oh * ow, kh * kw * c), oh, ow


def conv2d_size_out(size, kernel_size, stride):
    return (size - (kernel_size - 1) - 1) // stride + 1


# ----------------------------------------------------------------------------
# Parameters: generated PyTorch-style, then transformed ONCE into GEMM-ready form
# ----------------------------------------------------------------------------
def init_params(key, h, w, outputs):
    convw = conv2d_size_out(conv2d_size_out(conv2d_size_out(w, 8, 4), 4, 2), 3, 1)
    convh = conv2d_size_out(conv2d_size_out(conv2d_size_out(h, 8, 4), 4, 2), 3, 1)
    lin_in = convw * convh * 64

    ks = jax.random.split(key, 7)
    # PyTorch-layout weights (as if read out of the nn.Module).
    w1_pt = jax.random.normal(ks[0], (32, STACK_SIZE, 8, 8), jnp.float32) * 0.05
    w2_pt = jax.random.normal(ks[1], (64, 32, 4, 4), jnp.float32) * 0.05
    w3_pt = jax.random.normal(ks[2], (64, 64, 3, 3), jnp.float32) * 0.05
    fc_w_pt = jax.random.normal(ks[3], (512, lin_in), jnp.float32) * 0.02
    fc_b_pt = jax.random.normal(ks[4], (512,), jnp.float32) * 0.02
    head_w_pt = jax.random.normal(ks[5], (outputs, 512), jnp.float32) * 0.02
    head_b_pt = jax.random.normal(ks[6], (outputs,), jnp.float32) * 0.02
    # Conv biases omitted: they cancel exactly under training-mode BatchNorm.

    def conv_w(w_pt):
        oc, c, kh, kw = w_pt.shape
        # (OC, C, KH, KW) -> (KH, KW, C, OC) -> (KH*KW*C, OC)   [matches im2col K order]
        return jnp.transpose(w_pt, (2, 3, 1, 0)).reshape(kh * kw * c, oc)

    p = {
        "w1": (conv_w(w1_pt) / 255.0).astype(jnp.bfloat16),   # /255 folded into conv1
        "w2": conv_w(w2_pt).astype(jnp.bfloat16),
        "w3": conv_w(w3_pt).astype(jnp.bfloat16),
    }
    for i, c in ((1, 32), (2, 64), (3, 64)):                   # fresh BN: gamma=1, beta=0
        p[f"gamma{i}"] = jnp.ones((1, c), jnp.float32)
        p[f"beta{i}"] = jnp.zeros((1, c), jnp.float32)

    # fc: permute input columns from NCHW-flatten (C,H,W) order to NHWC-flatten (H,W,C).
    fc_w_nhwc = (fc_w_pt.reshape(512, 64, convh, convw)
                 .transpose(0, 2, 3, 1).reshape(512, lin_in))
    p["fc_w"] = fc_w_nhwc.T.astype(jnp.bfloat16)               # (lin_in, 512)
    p["fc_b"] = fc_b_pt.reshape(1, 512)
    p["head_w"] = head_w_pt.T.astype(jnp.bfloat16)             # (512, outputs)
    p["head_b"] = head_b_pt.reshape(1, outputs)
    return p


# ----------------------------------------------------------------------------
# DQN forward
# ----------------------------------------------------------------------------
@jax.jit
def dqn_forward(params, x_uint8):
    # NCHW uint8 -> NHWC bf16 once (the /255 preprocessing lives inside w1).
    x = x_uint8.transpose(0, 2, 3, 1).astype(jnp.bfloat16)
    n = x.shape[0]

    # conv1 + bn1 + relu (fused kernel)
    p1, oh1, ow1 = im2col_nhwc(x, 8, 8, 4)
    x = _conv_call(p1, params["w1"], params["gamma1"], params["beta1"]).reshape(n, oh1, ow1, 32)

    # conv2 + bn2 + relu (fused kernel)
    p2, oh2, ow2 = im2col_nhwc(x, 4, 4, 2)
    x = _conv_call(p2, params["w2"], params["gamma2"], params["beta2"]).reshape(n, oh2, ow2, 64)

    oh3 = (oh2 - 3) // 1 + 1
    ow3 = (ow2 - 3) // 1 + 1
    if oh3 == 1 and ow3 == 1:
        # conv3 + bn3 + relu + flatten + fc + relu + head, all in ONE kernel:
        # the single 3x3 conv3 patch per sample is exactly the conv2 feature map.
        x3 = x.reshape(n, -1)                                   # (N, 3*3*64), (KH,KW,C) order
        return _tail_call(x3, params["w3"], params["gamma3"], params["beta3"],
                          params["fc_w"], params["fc_b"],
                          params["head_w"], params["head_b"])

    # General-spatial fallback: conv3 via the shared conv kernel, then fused fc+head.
    p3, oh3, ow3 = im2col_nhwc(x, 3, 3, 1)
    y3 = _conv_call(p3, params["w3"], params["gamma3"], params["beta3"])
    xf = y3.reshape(n, oh3 * ow3 * 64)                          # NHWC flatten (fc_w permuted at init)
    return _fc_head_call(xf, params["fc_w"], params["fc_b"],
                         params["head_w"], params["head_b"])


if __name__ == "__main__":
    H = W = 36          # small spatial size; the conv stack reduces it to 1x1
    BATCH = 2
    OUTPUTS = 6

    key = jax.random.PRNGKey(0)
    pkey, xkey = jax.random.split(key)
    params = init_params(pkey, H, W, OUTPUTS)
    x = jax.random.randint(xkey, (BATCH, STACK_SIZE, H, W), 0, 256, jnp.int32).astype(jnp.uint8)

    out = dqn_forward(params, x)
    jax.block_until_ready(out)
    assert out.shape == (BATCH, OUTPUTS) and out.dtype == jnp.float32
    print("KERNEL_OK")
</pallas_src>

<mosaic_0001>
module attributes {stable_mosaic.version = 11 : i64} {
  func.func @conv_bn_relu_kernel(%arg0: memref<128x256xbf16, #tpu.memory_space<vmem>>, %arg1: memref<256x32xbf16, #tpu.memory_space<vmem>>, %arg2: memref<1x32xf32, #tpu.memory_space<vmem>>, %arg3: memref<1x32xf32, #tpu.memory_space<vmem>>, %arg4: memref<128x32xbf16, #tpu.memory_space<vmem>>) attributes {dimension_semantics = [], scalar_prefetch = 0 : i64, scratch_operands = 0 : i64, tpu.core_type = #tpu.core_type<tc>} {
    %c0 = arith.constant 0 : index
    %c0_0 = arith.constant 0 : index
    %0 = vector.load %arg0[%c0, %c0_0] : memref<128x256xbf16, #tpu.memory_space<vmem>>, vector<128x256xbf16>
    %c0_1 = arith.constant 0 : index
    %c0_2 = arith.constant 0 : index
    %1 = vector.load %arg1[%c0_1, %c0_2] : memref<256x32xbf16, #tpu.memory_space<vmem>>, vector<256x32xbf16>
    %cst = arith.constant dense<0.000000e+00> : vector<128x32xf32>
    %2 = tpu.matmul %0, %1, %cst {dimension_numbers = #tpu.dot_dimension_numbers<[1], [0], [0], [1], [0, 0, 1, 1], [], []>} : vector<128x256xbf16>, vector<256x32xbf16>, vector<128x32xf32> -> vector<128x32xf32>
    %cst_3 = arith.constant dense<0.000000e+00> : vector<32xf32>
    %3 = vector.multi_reduction <add>, %2, %cst_3 [0] : vector<128x32xf32> to vector<32xf32>
    %4 = vector.shape_cast %3 : vector<32xf32> to vector<1x32xf32>
    %cst_4 = arith.constant 7.812500e-03 : f32
    %5 = vector.broadcast %cst_4 : f32 to vector<1x32xf32>
    %6 = arith.mulf %4, %5 : vector<1x32xf32>
    %7 = arith.mulf %2, %2 : vector<128x32xf32>
    %cst_5 = arith.constant dense<0.000000e+00> : vector<32xf32>
    %8 = vector.multi_reduction <add>, %7, %cst_5 [0] : vector<128x32xf32> to vector<32xf32>
    %9 = vector.shape_cast %8 : vector<32xf32> to vector<1x32xf32>
    %cst_6 = arith.constant 7.812500e-03 : f32
    %10 = vector.broadcast %cst_6 : f32 to vector<1x32xf32>
    %11 = arith.mulf %9, %10 : vector<1x32xf32>
    %12 = arith.mulf %6, %6 : vector<1x32xf32>
    %13 = arith.subf %11, %12 : vector<1x32xf32>
    %cst_7 = arith.constant 0.000000e+00 : f32
    %14 = vector.broadcast %cst_7 : f32 to vector<1x32xf32>
    %15 = arith.maximumf %13, %14 : vector<1x32xf32>
    %c0_8 = arith.constant 0 : index
    %c0_9 = arith.constant 0 : index
    %16 = vector.load %arg2[%c0_8, %c0_9] : memref<1x32xf32, #tpu.memory_space<vmem>>, vector<1x32xf32>
    %cst_10 = arith.constant 9.99999974E-6 : f32
    %17 = vector.broadcast %cst_10 : f32 to vector<1x32xf32>
    %18 = arith.addf %15, %17 : vector<1x32xf32>
    %19 = math.rsqrt %18 : vector<1x32xf32>
    %20 = arith.mulf %16, %19 : vector<1x32xf32>
    %c0_11 = arith.constant 0 : index
    %c0_12 = arith.constant 0 : index
    %21 = vector.load %arg3[%c0_11, %c0_12] : memref<1x32xf32, #tpu.memory_space<vmem>>, vector<1x32xf32>
    %22 = arith.mulf %6, %20 : vector<1x32xf32>
    %23 = arith.subf %21, %22 : vector<1x32xf32>
    %24 = vector.broadcast %20 : vector<1x32xf32> to vector<128x32xf32>
    %25 = arith.mulf %2, %24 : vector<128x32xf32>
    %26 = vector.broadcast %23 : vector<1x32xf32> to vector<128x32xf32>
    %27 = arith.addf %25, %26 : vector<128x32xf32>
    %cst_13 = arith.constant 0.000000e+00 : f32
    %28 = vector.broadcast %cst_13 : f32 to vector<128x32xf32>
    %29 = arith.maximumf %27, %28 : vector<128x32xf32>
    %30 = arith.truncf %29 : vector<128x32xf32> to vector<128x32xbf16>
    %c0_14 = arith.constant 0 : index
    %c0_15 = arith.constant 0 : index
    %31 = vector.load %arg4[%c0_14, %c0_15] : memref<128x32xbf16, #tpu.memory_space<vmem>>, vector<128x32xbf16>
    tpu.vector_store %arg4[%c0_14, %c0_15], %30 {strides = array<i32>} : memref<128x32xbf16, #tpu.memory_space<vmem>>, vector<128x32xbf16>,
    return
  }
}

module attributes {stable_mosaic.version = 11 : i64} {
  func.func @conv_bn_relu_kernel(%arg0: memref<18x512xbf16, #tpu.memory_space<vmem>>, %arg1: memref<512x64xbf16, #tpu.memory_space<vmem>>, %arg2: memref<1x64xf32, #tpu.memory_space<vmem>>, %arg3: memref<1x64xf32, #tpu.memory_space<vmem>>, %arg4: memref<18x64xbf16, #tpu.memory_space<vmem>>) attributes {dimension_semantics = [], scalar_prefetch = 0 : i64, scratch_operands = 0 : i64, tpu.core_type = #tpu.core_type<tc>} {
    %c0 = arith.constant 0 : index
    %c0_0 = arith.constant 0 : index
    %0 = vector.load %arg0[%c0, %c0_0] : memref<18x512xbf16, #tpu.memory_space<vmem>>, vector<18x512xbf16>
    %c0_1 = arith.constant 0 : index
    %c0_2 = arith.constant 0 : index
    %1 = vector.load %arg1[%c0_1, %c0_2] : memref<512x64xbf16, #tpu.memory_space<vmem>>, vector<512x64xbf16>
    %cst = arith.constant dense<0.000000e+00> : vector<18x64xf32>
    %2 = tpu.matmul %0, %1, %cst {dimension_numbers = #tpu.dot_dimension_numbers<[1], [0], [0], [1], [0, 0, 1, 1], [], []>} : vector<18x512xbf16>, vector<512x64xbf16>, vector<18x64xf32> -> vector<18x64xf32>
    %cst_3 = arith.constant dense<0.000000e+00> : vector<64xf32>
    %3 = vector.multi_reduction <add>, %2, %cst_3 [0] : vector<18x64xf32> to vector<64xf32>
    %4 = vector.shape_cast %3 : vector<64xf32> to vector<1x64xf32>
    %cst_4 = arith.constant 0.055555556 : f32
    %5 = vector.broadcast %cst_4 : f32 to vector<1x64xf32>
    %6 = arith.mulf %4, %5 : vector<1x64xf32>
    %7 = arith.mulf %2, %2 : vector<18x64xf32>
    %cst_5 = arith.constant dense<0.000000e+00> : vector<64xf32>
    %8 = vector.multi_reduction <add>, %7, %cst_5 [0] : vector<18x64xf32> to vector<64xf32>
    %9 = vector.shape_cast %8 : vector<64xf32> to vector<1x64xf32>
    %cst_6 = arith.constant 0.055555556 : f32
    %10 = vector.broadcast %cst_6 : f32 to vector<1x64xf32>
    %11 = arith.mulf %9, %10 : vector<1x64xf32>
    %12 = arith.mulf %6, %6 : vector<1x64xf32>
    %13 = arith.subf %11, %12 : vector<1x64xf32>
    %cst_7 = arith.constant 0.000000e+00 : f32
    %14 = vector.broadcast %cst_7 : f32 to vector<1x64xf32>
    %15 = arith.maximumf %13, %14 : vector<1x64xf32>
    %c0_8 = arith.constant 0 : index
    %c0_9 = arith.constant 0 : index
    %16 = vector.load %arg2[%c0_8, %c0_9] : memref<1x64xf32, #tpu.memory_space<vmem>>, vector<1x64xf32>
    %cst_10 = arith.constant 9.99999974E-6 : f32
    %17 = vector.broadcast %cst_10 : f32 to vector<1x64xf32>
    %18 = arith.addf %15, %17 : vector<1x64xf32>
    %19 = math.rsqrt %18 : vector<1x64xf32>
    %20 = arith.mulf %16, %19 : vector<1x64xf32>
    %c0_11 = arith.constant 0 : index
    %c0_12 = arith.constant 0 : index
    %21 = vector.load %arg3[%c0_11, %c0_12] : memref<1x64xf32, #tpu.memory_space<vmem>>, vector<1x64xf32>
    %22 = arith.mulf %6, %20 : vector<1x64xf32>
    %23 = arith.subf %21, %22 : vector<1x64xf32>
    %24 = vector.broadcast %20 : vector<1x64xf32> to vector<18x64xf32>
    %25 = arith.mulf %2, %24 : vector<18x64xf32>
    %26 = vector.broadcast %23 : vector<1x64xf32> to vector<18x64xf32>
    %27 = arith.addf %25, %26 : vector<18x64xf32>
    %cst_13 = arith.constant 0.000000e+00 : f32
    %28 = vector.broadcast %cst_13 : f32 to vector<18x64xf32>
    %29 = arith.maximumf %27, %28 : vector<18x64xf32>
    %30 = arith.truncf %29 : vector<18x64xf32> to vector<18x64xbf16>
    %c0_14 = arith.constant 0 : index
    %c0_15 = arith.constant 0 : index
    %31 = vector.load %arg4[%c0_14, %c0_15] : memref<18x64xbf16, #tpu.memory_space<vmem>>, vector<18x64xbf16>
    tpu.vector_store %arg4[%c0_14, %c0_15], %30 {strides = array<i32>} : memref<18x64xbf16, #tpu.memory_space<vmem>>, vector<18x64xbf16>,
    return
  }
}

module attributes {stable_mosaic.version = 11 : i64} {
  func.func @tail_kernel(%arg0: memref<2x576xbf16, #tpu.memory_space<vmem>>, %arg1: memref<576x64xbf16, #tpu.memory_space<vmem>>, %arg2: memref<1x64xf32, #tpu.memory_space<vmem>>, %arg3: memref<1x64xf32, #tpu.memory_space<vmem>>, %arg4: memref<64x512xbf16, #tpu.memory_space<vmem>>, %arg5: memref<1x512xf32, #tpu.memory_space<vmem>>, %arg6: memref<512x6xbf16, #tpu.memory_space<vmem>>, %arg7: memref<1x6xf32, #tpu.memory_space<vmem>>, %arg8: memref<2x6xf32, #tpu.memory_space<vmem>>) attributes {dimension_semantics = [], scalar_prefetch = 0 : i64, scratch_operands = 0 : i64, tpu.core_type = #tpu.core_type<tc>} {
    %c0 = arith.constant 0 : index
    %c0_0 = arith.constant 0 : index
    %0 = vector.load %arg0[%c0, %c0_0] : memref<2x576xbf16, #tpu.memory_space<vmem>>, vector<2x576xbf16>
    %c0_1 = arith.constant 0 : index
    %c0_2 = arith.constant 0 : index
    %1 = vector.load %arg1[%c0_1, %c0_2] : memref<576x64xbf16, #tpu.memory_space<vmem>>, vector<576x64xbf16>
    %cst = arith.constant dense<0.000000e+00> : vector<2x64xf32>
    %2 = tpu.matmul %0, %1, %cst {dimension_numbers = #tpu.dot_dimension_numbers<[1], [0], [0], [1], [0, 0, 1, 1], [], []>} : vector<2x576xbf16>, vector<576x64xbf16>, vector<2x64xf32> -> vector<2x64xf32>
    %cst_3 = arith.constant dense<0.000000e+00> : vector<64xf32>
    %3 = vector.multi_reduction <add>, %2, %cst_3 [0] : vector<2x64xf32> to vector<64xf32>
    %4 = vector.shape_cast %3 : vector<64xf32> to vector<1x64xf32>
    %cst_4 = arith.constant 5.000000e-01 : f32
    %5 = vector.broadcast %cst_4 : f32 to vector<1x64xf32>
    %6 = arith.mulf %4, %5 : vector<1x64xf32>
    %7 = arith.mulf %2, %2 : vector<2x64xf32>
    %cst_5 = arith.constant dense<0.000000e+00> : vector<64xf32>
    %8 = vector.multi_reduction <add>, %7, %cst_5 [0] : vector<2x64xf32> to vector<64xf32>
    %9 = vector.shape_cast %8 : vector<64xf32> to vector<1x64xf32>
    %cst_6 = arith.constant 5.000000e-01 : f32
    %10 = vector.broadcast %cst_6 : f32 to vector<1x64xf32>
    %11 = arith.mulf %9, %10 : vector<1x64xf32>
    %12 = arith.mulf %6, %6 : vector<1x64xf32>
    %13 = arith.subf %11, %12 : vector<1x64xf32>
    %cst_7 = arith.constant 0.000000e+00 : f32
    %14 = vector.broadcast %cst_7 : f32 to vector<1x64xf32>
    %15 = arith.maximumf %13, %14 : vector<1x64xf32>
    %c0_8 = arith.constant 0 : index
    %c0_9 = arith.constant 0 : index
    %16 = vector.load %arg2[%c0_8, %c0_9] : memref<1x64xf32, #tpu.memory_space<vmem>>, vector<1x64xf32>
    %cst_10 = arith.constant 9.99999974E-6 : f32
    %17 = vector.broadcast %cst_10 : f32 to vector<1x64xf32>
    %18 = arith.addf %15, %17 : vector<1x64xf32>
    %19 = math.rsqrt %18 : vector<1x64xf32>
    %20 = arith.mulf %16, %19 : vector<1x64xf32>
    %c0_11 = arith.constant 0 : index
    %c0_12 = arith.constant 0 : index
    %21 = vector.load %arg3[%c0_11, %c0_12] : memref<1x64xf32, #tpu.memory_space<vmem>>, vector<1x64xf32>
    %22 = arith.mulf %6, %20 : vector<1x64xf32>
    %23 = arith.subf %21, %22 : vector<1x64xf32>
    %24 = vector.broadcast %20 : vector<1x64xf32> to vector<2x64xf32>
    %25 = arith.mulf %2, %24 : vector<2x64xf32>
    %26 = vector.broadcast %23 : vector<1x64xf32> to vector<2x64xf32>
    %27 = arith.addf %25, %26 : vector<2x64xf32>
    %cst_13 = arith.constant 0.000000e+00 : f32
    %28 = vector.broadcast %cst_13 : f32 to vector<2x64xf32>
    %29 = arith.maximumf %27, %28 : vector<2x64xf32>
    %30 = arith.truncf %29 : vector<2x64xf32> to vector<2x64xbf16>
    %c0_14 = arith.constant 0 : index
    %c0_15 = arith.constant 0 : index
    %31 = vector.load %arg4[%c0_14, %c0_15] : memref<64x512xbf16, #tpu.memory_space<vmem>>, vector<64x512xbf16>
    %cst_16 = arith.constant dense<0.000000e+00> : vector<2x512xf32>
    %32 = tpu.matmul %30, %31, %cst_16 {dimension_numbers = #tpu.dot_dimension_numbers<[1], [0], [0], [1], [0, 0, 1, 1], [], []>} : vector<2x64xbf16>, vector<64x512xbf16>, vector<2x512xf32> -> vector<2x512xf32>
    %c0_17 = arith.constant 0 : index
    %c0_18 = arith.constant 0 : index
    %33 = vector.load %arg5[%c0_17, %c0_18] : memref<1x512xf32, #tpu.memory_space<vmem>>, vector<1x512xf32>
    %34 = vector.broadcast %33 : vector<1x512xf32> to vector<2x512xf32>
    %35 = arith.addf %32, %34 : vector<2x512xf32>
    %cst_19 = arith.constant 0.000000e+00 : f32
    %36 = vector.broadcast %cst_19 : f32 to vector<2x512xf32>
    %37 = arith.maximumf %35, %36 : vector<2x512xf32>
    %38 = arith.truncf %37 : vector<2x512xf32> to vector<2x512xbf16>
    %c0_20 = arith.constant 0 : index
    %c0_21 = arith.constant 0 : index
    %39 = vector.load %arg6[%c0_20, %c0_21] : memref<512x6xbf16, #tpu.memory_space<vmem>>, vector<512x6xbf16>
    %cst_22 = arith.constant dense<0.000000e+00> : vector<2x6xf32>
    %40 = tpu.matmul %38, %39, %cst_22 {dimension_numbers = #tpu.dot_dimension_numbers<[1], [0], [0], [1], [0, 0, 1, 1], [], []>} : vector<2x512xbf16>, vector<512x6xbf16>, vector<2x6xf32> -> vector<2x6xf32>
    %c0_23 = arith.constant 0 : index
    %c0_24 = arith.constant 0 : index
    %41 = vector.load %arg7[%c0_23, %c0_24] : memref<1x6xf32, #tpu.memory_space<vmem>>, vector<1x6xf32>
    %42 = vector.broadcast %41 : vector<1x6xf32> to vector<2x6xf32>
    %43 = arith.addf %40, %42 : vector<2x6xf32>
    %c0_25 = arith.constant 0 : index
    %c0_26 = arith.constant 0 : index
    %44 = vector.load %arg8[%c0_25, %c0_26] : memref<2x6xf32, #tpu.memory_space<vmem>>, vector<2x6xf32>
    tpu.vector_store %arg8[%c0_25, %c0_26], %43 {strides = array<i32>} : memref<2x6xf32, #tpu.memory_space<vmem>>, vector<2x6xf32>,
    return
  }
}

</mosaic_0001>

<llo_original>
// kernel: dqn_forward.3
$region0: #{dqn_forward.3}
  #allocation0 [shape = 'u32[]', space=smem, size = 0x4, offset = 0x4, fixed_abs, tag = 'smem constant byte address 0x4 - core index']
  #allocation1 [shape = 'u32[144,128]{1,0:T(1,128)}', space=vmem, size = 0x12000, scoped, tag = 'internal scratch']
  %s0 = inlined_call_operand.vmem [shape: bf16[128,256], index: 0, kind: input, shape index: {}]
  %s1 = inlined_call_operand.vmem [shape: bf16[256,32], index: 1, kind: input, shape index: {}]
  %s2 = inlined_call_operand.vmem [shape: f32[1,32], index: 2, kind: input, shape index: {}]
  %s3 = inlined_call_operand.vmem [shape: f32[1,32], index: 3, kind: input, shape index: {}]
  %s4 = inlined_call_operand.vmem [shape: bf16[128,32], index: 4, kind: output, shape index: {}]
  %s5 = sld [smem:[#allocation0]]
  $region26: #{dqn_forward.3} parent=0
    _
  %s7 = ssub.s32 1, %s5
  %s8 = scalar_select 0, %s7, %s5
  // Predicated region
  $region2: #{dqn_forward.3} parent=0 // pred_check
    _
  $region3: #{dqn_forward.3} parent=0 // pred_check_branch
    %10 = sbr.rel (0) target = $region5
  $region4: #{dqn_forward.3} parent=0 // pred_region
    _
  $region5: #{dqn_forward.3} parent=0 // pred_fallthru
    _
  // Predicated region
  $region6: #{dqn_forward.3} parent=0 // pred_check
    _
  $region7: #{dqn_forward.3} parent=0 // pred_check_branch
    %12 = sbr.rel (0) target = $region9
  $region8: #{dqn_forward.3} parent=0 // pred_region
    _
  $region9: #{dqn_forward.3} parent=0 // pred_fallthru
    _
  // Predicated region
  $region10: #{dqn_forward.3} parent=0 // pred_check
    _
  $region11: #{dqn_forward.3} parent=0 // pred_check_branch
    %14 = sbr.rel (0) target = $region13
  $region12: #{dqn_forward.3} parent=0 // pred_region
    _
  $region13: #{dqn_forward.3} parent=0 // pred_fallthru
    _
  // Predicated region
  $region14: #{dqn_forward.3} parent=0 // pred_check
    _
  $region15: #{dqn_forward.3} parent=0 // pred_check_branch
    %16 = sbr.rel (0) target = $region17
  $region16: #{dqn_forward.3} parent=0 // pred_region
    _
  $region17: #{dqn_forward.3} parent=0 // pred_fallthru
    _
  %v18 = vld [vmem:[%s0] sm:$0xff]
  %v19 = vld [vmem:[%s0 + $0x8] sm:$0xff]
  %v20 = vld [vmem:[%s0 + $0x10] sm:$0xff]
  %v21 = vld [vmem:[%s0 + $0x18] sm:$0xff]
  %v22 = vld [vmem:[%s0 + $0x20] sm:$0xff]
  %v23 = vld [vmem:[%s0 + $0x28] sm:$0xff]
  %v24 = vld [vmem:[%s0 + $0x30] sm:$0xff]
  %v25 = vld [vmem:[%s0 + $0x38] sm:$0xff]
  %v26 = vld [vmem:[%s0 + $0x40] sm:$0xff]
  %v27 = vld [vmem:[%s0 + $0x48] sm:$0xff]
  %v28 = vld [vmem:[%s0 + $0x50] sm:$0xff]
  %v29 = vld [vmem:[%s0 + $0x58] sm:$0xff]
  %v30 = vld [vmem:[%s0 + $0x60] sm:$0xff]
  %v31 = vld [vmem:[%s0 + $0x68] sm:$0xff]
  %v32 = vld [vmem:[%s0 + $0x70] sm:$0xff]
  %v33 = vld [vmem:[%s0 + $0x78] sm:$0xff]
  %v34 = vld [vmem:[%s1] sm:$0xf]
  %v35 = vld [vmem:[%s1 + $0x4] sm:$0xf]
  %v36 = vld [vmem:[%s1 + $0x8] sm:$0xf]
  %v37 = vld [vmem:[%s1 + $0xc] sm:$0xf]
  %v38 = vld [vmem:[%s1 + $0x10] sm:$0xf]
  %v39 = vld [vmem:[%s1 + $0x14] sm:$0xf]
  %v40 = vld [vmem:[%s1 + $0x18] sm:$0xf]
  %v41 = vld [vmem:[%s1 + $0x1c] sm:$0xf]
  %v42 = vld [vmem:[%s1 + $0x20] sm:$0xf]
  %v43 = vld [vmem:[%s1 + $0x24] sm:$0xf]
  %v44 = vld [vmem:[%s1 + $0x28] sm:$0xf]
  %v45 = vld [vmem:[%s1 + $0x2c] sm:$0xf]
  %v46 = vld [vmem:[%s1 + $0x30] sm:$0xf]
  %v47 = vld [vmem:[%s1 + $0x34] sm:$0xf]
  %v48 = vld [vmem:[%s1 + $0x38] sm:$0xf]
  %v49 = vld [vmem:[%s1 + $0x3c] sm:$0xf]
  %v50 = vld [vmem:[%s1 + $0x40] sm:$0xf]
  %v51 = vld [vmem:[%s1 + $0x44] sm:$0xf]
  %v52 = vld [vmem:[%s1 + $0x48] sm:$0xf]
  %v53 = vld [vmem:[%s1 + $0x4c] sm:$0xf]
  %v54 = vld [vmem:[%s1 + $0x50] sm:$0xf]
  %v55 = vld [vmem:[%s1 + $0x54] sm:$0xf]
  %v56 = vld [vmem:[%s1 + $0x58] sm:$0xf]
  %v57 = vld [vmem:[%s1 + $0x5c] sm:$0xf]
  %v58 = vld [vmem:[%s1 + $0x60] sm:$0xf]
  %v59 = vld [vmem:[%s1 + $0x64] sm:$0xf]
  %v60 = vld [vmem:[%s1 + $0x68] sm:$0xf]
  %v61 = vld [vmem:[%s1 + $0x6c] sm:$0xf]
  %v62 = vld [vmem:[%s1 + $0x70] sm:$0xf]
  %v63 = vld [vmem:[%s1 + $0x74] sm:$0xf]
  %v64 = vld [vmem:[%s1 + $0x78] sm:$0xf]
  %v65 = vld [vmem:[%s1 + $0x7c] sm:$0xf]
  %v82 = vunpack.c.l.b16 %v18
  %v83 = vunpack.c.h.b16 %v18
  %v84 = vunpack.c.l.b16 %v19
  %v85 = vunpack.c.h.b16 %v19
  %v86 = vunpack.c.l.b16 %v20
  %v87 = vunpack.c.h.b16 %v20
  %v88 = vunpack.c.l.b16 %v21
  %v89 = vunpack.c.h.b16 %v21
  %v90 = vunpack.c.l.b16 %v22
  %v91 = vunpack.c.h.b16 %v22
  %v92 = vunpack.c.l.b16 %v23
  %v93 = vunpack.c.h.b16 %v23
  %v94 = vunpack.c.l.b16 %v24
  %v95 = vunpack.c.h.b16 %v24
  %v96 = vunpack.c.l.b16 %v25
  %v97 = vunpack.c.h.b16 %v25
  %v98 = vunpack.c.l.b16 %v26
  %v99 = vunpack.c.h.b16 %v26
  %v100 = vunpack.c.l.b16 %v27
  %v101 = vunpack.c.h.b16 %v27
  %v102 = vunpack.c.l.b16 %v28
  %v103 = vunpack.c.h.b16 %v28
  %v104 = vunpack.c.l.b16 %v29
  %v105 = vunpack.c.h.b16 %v29
  %v106 = vunpack.c.l.b16 %v30
  %v107 = vunpack.c.h.b16 %v30
  %v108 = vunpack.c.l.b16 %v31
  %v109 = vunpack.c.h.b16 %v31
  %v110 = vunpack.c.l.b16 %v32
  %v111 = vunpack.c.h.b16 %v32
  %v112 = vunpack.c.l.b16 %v33
  %v113 = vunpack.c.h.b16 %v33
  %v114 = vpack.c.b16 %v84, %v82
  %v115 = vpack.c.b16 %v85, %v83
  %v116 = vpack.c.b16 %v88, %v86
  %v117 = vpack.c.b16 %v89, %v87
  %v118 = vpack.c.b16 %v92, %v90
  %v119 = vpack.c.b16 %v93, %v91
  %v120 = vpack.c.b16 %v96, %v94
  %v121 = vpack.c.b16 %v97, %v95
  %v122 = vpack.c.b16 %v100, %v98
  %v123 = vpack.c.b16 %v101, %v99
  %v124 = vpack.c.b16 %v104, %v102
  %v125 = vpack.c.b16 %v105, %v103
  %v126 = vpack.c.b16 %v108, %v106
  %v127 = vpack.c.b16 %v109, %v107
  %v128 = vpack.c.b16 %v112, %v110
  %v129 = vpack.c.b16 %v113, %v111
  %v178 = vunpack.c.l.b16 %v34
  %v179 = vunpack.c.l.b16 %v35
  %v180 = vunpack.c.l.b16 %v36
  %v181 = vunpack.c.l.b16 %v37
  %v182 = vunpack.c.l.b16 %v38
  %v183 = vunpack.c.l.b16 %v39
  %v184 = vunpack.c.l.b16 %v40
  %v185 = vunpack.c.l.b16 %v41
  %v186 = vunpack.c.l.b16 %v42
  %v187 = vunpack.c.l.b16 %v43
  %v188 = vunpack.c.l.b16 %v44
  %v189 = vunpack.c.l.b16 %v45
  %v190 = vunpack.c.l.b16 %v46
  %v191 = vunpack.c.l.b16 %v47
  %v192 = vunpack.c.l.b16 %v48
  %v193 = vunpack.c.l.b16 %v49
  %v194 = vunpack.c.l.b16 %v50
  %v195 = vunpack.c.l.b16 %v51
  %v196 = vunpack.c.l.b16 %v52
  %v197 = vunpack.c.l.b16 %v53
  %v198 = vunpack.c.l.b16 %v54
  %v199 = vunpack.c.l.b16 %v55
  %v200 = vunpack.c.l.b16 %v56
  %v201 = vunpack.c.l.b16 %v57
  %v202 = vunpack.c.l.b16 %v58
  %v203 = vunpack.c.l.b16 %v59
  %v204 = vunpack.c.l.b16 %v60
  %v205 = vunpack.c.l.b16 %v61
  %v206 = vunpack.c.l.b16 %v62
  %v207 = vunpack.c.l.b16 %v63
  %v208 = vunpack.c.l.b16 %v64
  %v209 = vunpack.c.l.b16 %v65
  %v210 = vpack.c.b16 %v179, %v178
  %v211 = vpack.c.b16 %v181, %v180
  %v212 = vpack.c.b16 %v183, %v182
  %v213 = vpack.c.b16 %v185, %v184
  %v214 = vpack.c.b16 %v187, %v186
  %v215 = vpack.c.b16 %v189, %v188
  %v216 = vpack.c.b16 %v191, %v190
  %v217 = vpack.c.b16 %v193, %v192
  %v218 = vpack.c.b16 %v195, %v194
  %v219 = vpack.c.b16 %v197, %v196
  %v220 = vpack.c.b16 %v199, %v198
  %v221 = vpack.c.b16 %v201, %v200
  %v222 = vpack.c.b16 %v203, %v202
  %v223 = vpack.c.b16 %v205, %v204
  %v224 = vpack.c.b16 %v207, %v206
  %v225 = vpack.c.b16 %v209, %v208
  %242 = vmatprep.subr.bf16.mxu0 0
  %243 = vmatpush1.bf16.msra.mxu0 %v210
  %244 = vmatprep.subr.bf16.mxu0 0
  %245 = vmatpush1.bf16.msra.mxu0 %v211
  %246 = vmatprep.subr.bf16.mxu0 0
  %247 = vmatpush1.bf16.msra.mxu0 %v212
  %248 = vmatprep.subr.bf16.mxu0 0
  %249 = vmatpush1.bf16.msra.mxu0 %v213
  %250 = vmatprep.subr.bf16.mxu0 0
  %251 = vmatpush1.bf16.msra.mxu0 %v214
  %252 = vmatprep.subr.bf16.mxu0 0
  %253 = vmatpush1.bf16.msra.mxu0 %v215
  %254 = vmatprep.subr.bf16.mxu0 0
  %255 = vmatpush1.bf16.msra.mxu0 %v216
  %256 = vmatprep.subr.bf16.mxu0 0
  %257 = vmatpush1.bf16.msra.mxu0 %v217
  %258 = vmatprep.subr.bf16.mxu0 0
  %259 = vmatpush1.bf16.msra.mxu0 %v218
  %260 = vmatprep.subr.bf16.mxu0 0
  %261 = vmatpush1.bf16.msra.mxu0 %v219
  %262 = vmatprep.subr.bf16.mxu0 0
  %263 = vmatpush1.bf16.msra.mxu0 %v220
  %264 = vmatprep.subr.bf16.mxu0 0
  %265 = vmatpush1.bf16.msra.mxu0 %v221
  %266 = vmatprep.subr.bf16.mxu0 0
  %267 = vmatpush1.bf16.msra.mxu0 %v222
  %268 = vmatprep.subr.bf16.mxu0 0
  %269 = vmatpush1.bf16.msra.mxu0 %v223
  %270 = vmatprep.subr.bf16.mxu0 0
  %271 = vmatpush1.bf16.msra.mxu0 %v224
  %272 = vmatprep.subr.bf16.mxu0 0
  %273 = vmatpush1.bf16.msra.mxu0 %v225
  %274 = vmatprep.mubr.bf16.mxu0 %v115
  %275 = vmatmul.mubr.bf16.gmra.mrb[0].mxu0 %v114
  %v276 = vpop.f32.mrb[0].mxu0
  %v277 = vadd.f32 0.0, %v276
  %v278 = vpop.f32.mrb[0].mxu0
  %v279 = vpop.f32.mrb[0].mxu0
  %v280 = vadd.f32 0.0, %v279
  %v281 = vpop.f32.mrb[0].mxu0
  %282 = vmatprep.mubr.bf16.mxu0 %v117
  %283 = vmatmul.mubr.bf16.gmra.mrb[0].mxu0 %v116
  %v284 = vpop.f32.mrb[0].mxu0
  %v285 = vadd.f32 0.0, %v284
  %v286 = vpop.f32.mrb[0].mxu0
  %v287 = vpop.f32.mrb[0].mxu0
  %v288 = vadd.f32 0.0, %v287
  %v289 = vpop.f32.mrb[0].mxu0
  %290 = vmatprep.mubr.bf16.mxu0 %v119
  %291 = vmatmul.mubr.bf16.gmra.mrb[0].mxu0 %v118
  %v292 = vpop.f32.mrb[0].mxu0
  %v293 = vadd.f32 0.0, %v292
  %v294 = vpop.f32.mrb[0].mxu0
  %v295 = vpop.f32.mrb[0].mxu0
  %v296 = vadd.f32 0.0, %v295
  %v297 = vpop.f32.mrb[0].mxu0
  %298 = vmatprep.mubr.bf16.mxu0 %v121
  %299 = vmatmul.mubr.bf16.gmra.mrb[0].mxu0 %v120
  %v300 = vpop.f32.mrb[0].mxu0
  %v301 = vadd.f32 0.0, %v300
  %v302 = vpop.f32.mrb[0].mxu0
  %v303 = vpop.f32.mrb[0].mxu0
  %v304 = vadd.f32 0.0, %v303
  %v305 = vpop.f32.mrb[0].mxu0
  %306 = vmatprep.mubr.bf16.mxu0 %v123
  %307 = vmatmul.mubr.bf16.gmra.mrb[0].mxu0 %v122
  %v308 = vpop.f32.mrb[0].mxu0
  %v309 = vadd.f32 0.0, %v308
  %v310 = vpop.f32.mrb[0].mxu0
  %v311 = vpop.f32.mrb[0].mxu0
  %v312 = vadd.f32 0.0, %v311
  %v313 = vpop.f32.mrb[0].mxu0
  %314 = vmatprep.mubr.bf16.mxu0 %v125
  %315 = vmatmul.mubr.bf16.gmra.mrb[0].mxu0 %v124
  %v316 = vpop.f32.mrb[0].mxu0
  %v317 = vadd.f32 0.0, %v316
  %v318 = vpop.f32.mrb[0].mxu0
  %v319 = vpop.f32.mrb[0].mxu0
  %v320 = vadd.f32 0.0, %v319
  %v321 = vpop.f32.mrb[0].mxu0
  %322 = vmatprep.mubr.bf16.mxu0 %v127
  %323 = vmatmul.mubr.bf16.gmra.mrb[0].mxu0 %v126
  %v324 = vpop.f32.mrb[0].mxu0
  %v325 = vadd.f32 0.0, %v324
  %v326 = vpop.f32.mrb[0].mxu0
  %v327 = vpop.f32.mrb[0].mxu0
  %v328 = vadd.f32 0.0, %v327
  %v329 = vpop.f32.mrb[0].mxu0
  %330 = vmatprep.mubr.bf16.mxu0 %v129
  %331 = vmatmul.mubr.bf16.gmra.mrb[0].mxu0 %v128
  %v332 = vpop.f32.mrb[0].mxu0
  %v333 = vadd.f32 0.0, %v332
  %v334 = vpop.f32.mrb[0].mxu0
  %v335 = vpop.f32.mrb[0].mxu0
  %v336 = vadd.f32 0.0, %v335
  %v337 = vpop.f32.mrb[0].mxu0
  %338 = vdwg.mxu0
  %vm339 = vcmask 261120
  %v340 = vsel %vm339, %v277, 0.0
  %v341 = vsel %vm339, %v280, 0.0
  %v342 = vadd.f32 %v340, %v341
  %v343 = vsel %vm339, %v285, 0.0
  %v344 = vadd.f32 %v342, %v343
  %v345 = vsel %vm339, %v288, 0.0
  %v346 = vadd.f32 %v344, %v345
  %v347 = vsel %vm339, %v293, 0.0
  %v348 = vadd.f32 %v346, %v347
  %v349 = vsel %vm339, %v296, 0.0
  %v350 = vadd.f32 %v348, %v349
  %v351 = vsel %vm339, %v301, 0.0
  %v352 = vadd.f32 %v350, %v351
  %v353 = vsel %vm339, %v304, 0.0
  %v354 = vadd.f32 %v352, %v353
  %v355 = vsel %vm339, %v309, 0.0
  %v356 = vadd.f32 %v354, %v355
  %v357 = vsel %vm339, %v312, 0.0
  %v358 = vadd.f32 %v356, %v357
  %v359 = vsel %vm339, %v317, 0.0
  %v360 = vadd.f32 %v358, %v359
  %v361 = vsel %vm339, %v320, 0.0
  %v362 = vadd.f32 %v360, %v361
  %v363 = vsel %vm339, %v325, 0.0
  %v364 = vadd.f32 %v362, %v363
  %v365 = vsel %vm339, %v328, 0.0
  %v366 = vadd.f32 %v364, %v365
  %v367 = vsel %vm339, %v333, 0.0
  %v368 = vadd.f32 %v366, %v367
  %v369 = vsel %vm339, %v336, 0.0
  %v370 = vadd.f32 %v368, %v369
  %v371 = vrot.slane %v370, 4
  %v372 = vadd.f32 %v370, %v371
  %v373 = vrot.slane %v372, 2
  %v374 = vadd.f32 %v372, %v373
  %v375 = vrot.slane %v374, 1
  %v376 = vadd.f32 %v374, %v375
  %v377 = vmul.f32 %v376, 0.0078125
  %v378 = vmul.f32 %v277, %v277
  %v379 = vmul.f32 %v280, %v280
  %v380 = vmul.f32 %v285, %v285
  %v381 = vmul.f32 %v288, %v288
  %v382 = vmul.f32 %v293, %v293
  %v383 = vmul.f32 %v296, %v296
  %v384 = vmul.f32 %v301, %v301
  %v385 = vmul.f32 %v304, %v304
  %v386 = vmul.f32 %v309, %v309
  %v387 = vmul.f32 %v312, %v312
  %v388 = vmul.f32 %v317, %v317
  %v389 = vmul.f32 %v320, %v320
  %v390 = vmul.f32 %v325, %v325
  %v391 = vmul.f32 %v328, %v328
  %v392 = vmul.f32 %v333, %v333
  %v393 = vmul.f32 %v336, %v336
  %v394 = vsel %vm339, %v378, 0.0
  %v395 = vsel %vm339, %v379, 0.0
  %v396 = vadd.f32 %v394, %v395
  %v397 = vsel %vm339, %v380, 0.0
  %v398 = vadd.f32 %v396, %v397
  %v399 = vsel %vm339, %v381, 0.0
  %v400 = vadd.f32 %v398, %v399
  %v401 = vsel %vm339, %v382, 0.0
  %v402 = vadd.f32 %v400, %v401
  %v403 = vsel %vm339, %v383, 0.0
  %v404 = vadd.f32 %v402, %v403
  %v405 = vsel %vm339, %v384, 0.0
  %v406 = vadd.f32 %v404, %v405
  %v407 = vsel %vm339, %v385, 0.0
  %v408 = vadd.f32 %v406, %v407
  %v409 = vsel %vm339, %v386, 0.0
  %v410 = vadd.f32 %v408, %v409
  %v411 = vsel %vm339, %v387, 0.0
  %v412 = vadd.f32 %v410, %v411
  %v413 = vsel %vm339, %v388, 0.0
  %v414 = vadd.f32 %v412, %v413
  %v415 = vsel %vm339, %v389, 0.0
  %v416 = vadd.f32 %v414, %v415
  %v417 = vsel %vm339, %v390, 0.0
  %v418 = vadd.f32 %v416, %v417
  %v419 = vsel %vm339, %v391, 0.0
  %v420 = vadd.f32 %v418, %v419
  %v421 = vsel %vm339, %v392, 0.0
  %v422 = vadd.f32 %v420, %v421
  %v423 = vsel %vm339, %v393, 0.0
  %v424 = vadd.f32 %v422, %v423
  %v425 = vrot.slane %v424, 4
  %v426 = vadd.f32 %v424, %v425
  %v427 = vrot.slane %v426, 2
  %v428 = vadd.f32 %v426, %v427
  %v429 = vrot.slane %v428, 1
  %v430 = vadd.f32 %v428, %v429
  %v431 = vmul.f32 %v430, 0.0078125
  %v432 = vmul.f32 %v377, %v377
  %v433 = vsub.f32 %v431, %v432
  %v434 = vmax.f32 %v433, 0.0
  %v435 = vld [vmem:[%s2] sm:$0x1]
  %v436 = vadd.f32 %v434, 1e-05
  %v437 = vrsqrt.pop %v436
  %v438 = vmul.f32 %v435, %v437
  %v439 = vld [vmem:[%s3] sm:$0x1]
  %v440 = vmul.f32 %v377, %v438
  %v441 = vsub.f32 %v439, %v440
  %v443 = vlaneseq
  %v444 = vshrl.u32 %v443, 7
  %v445 = vsub.s32 0, %v444
  %v446 = vrot.slane %v438, %v445
  %v448 = vmul.f32 %v277, %v446
  %v449 = vmul.f32 %v280, %v446
  %v450 = vmul.f32 %v285, %v446
  %v451 = vmul.f32 %v288, %v446
  %v452 = vmul.f32 %v293, %v446
  %v453 = vmul.f32 %v296, %v446
  %v454 = vmul.f32 %v301, %v446
  %v455 = vmul.f32 %v304, %v446
  %v456 = vmul.f32 %v309, %v446
  %v457 = vmul.f32 %v312, %v446
  %v458 = vmul.f32 %v317, %v446
  %v459 = vmul.f32 %v320, %v446
  %v460 = vmul.f32 %v325, %v446
  %v461 = vmul.f32 %v328, %v446
  %v462 = vmul.f32 %v333, %v446
  %v463 = vmul.f32 %v336, %v446
  %v465 = vlaneseq
  %v466 = vshrl.u32 %v465, 7
  %v467 = vsub.s32 0, %v466
  %v468 = vrot.slane %v441, %v467
  %v470 = vadd.f32 %v448, %v468
  %v471 = vadd.f32 %v449, %v468
  %v472 = vadd.f32 %v450, %v468
  %v473 = vadd.f32 %v451, %v468
  %v474 = vadd.f32 %v452, %v468
  %v475 = vadd.f32 %v453, %v468
  %v476 = vadd.f32 %v454, %v468
  %v477 = vadd.f32 %v455, %v468
  %v478 = vadd.f32 %v456, %v468
  %v479 = vadd.f32 %v457, %v468
  %v480 = vadd.f32 %v458, %v468
  %v481 = vadd.f32 %v459, %v468
  %v482 = vadd.f32 %v460, %v468
  %v483 = vadd.f32 %v461, %v468
  %v484 = vadd.f32 %v462, %v468
  %v485 = vadd.f32 %v463, %v468
  %v486 = vmax.f32 %v470, 0.0
  %v487 = vmax.f32 %v471, 0.0
  %v488 = vmax.f32 %v472, 0.0
  %v489 = vmax.f32 %v473, 0.0
  %v490 = vmax.f32 %v474, 0.0
  %v491 = vmax.f32 %v475, 0.0
  %v492 = vmax.f32 %v476, 0.0
  %v493 = vmax.f32 %v477, 0.0
  %v494 = vmax.f32 %v478, 0.0
  %v495 = vmax.f32 %v479, 0.0
  %v496 = vmax.f32 %v480, 0.0
  %v497 = vmax.f32 %v481, 0.0
  %v498 = vmax.f32 %v482, 0.0
  %v499 = vmax.f32 %v483, 0.0
  %v500 = vmax.f32 %v484, 0.0
  %v501 = vmax.f32 %v485, 0.0
  %v502 = vpack.c.bf16 %v487, %v486
  %v503 = vpack.c.bf16 %v489, %v488
  %v504 = vpack.c.bf16 %v491, %v490
  %v505 = vpack.c.bf16 %v493, %v492
  %v506 = vpack.c.bf16 %v495, %v494
  %v507 = vpack.c.bf16 %v497, %v496
  %v508 = vpack.c.bf16 %v499, %v498
  %v509 = vpack.c.bf16 %v501, %v500
  %v518 = vunpack.c.l.b16 %v502
  %v519 = vunpack.c.h.b16 %v502
  %v520 = vunpack.c.l.b16 %v503
  %v521 = vunpack.c.h.b16 %v503
  %v522 = vunpack.c.l.b16 %v504
  %v523 = vunpack.c.h.b16 %v504
  %v524 = vunpack.c.l.b16 %v505
  %v525 = vunpack.c.h.b16 %v505
  %v526 = vunpack.c.l.b16 %v506
  %v527 = vunpack.c.h.b16 %v506
  %v528 = vunpack.c.l.b16 %v507
  %v529 = vunpack.c.h.b16 %v507
  %v530 = vunpack.c.l.b16 %v508
  %v531 = vunpack.c.h.b16 %v508
  %v532 = vunpack.c.l.b16 %v509
  %v533 = vunpack.c.h.b16 %v509
  %v534 = vpack.c.b16 %v518, %v518
  %v535 = vpack.c.b16 %v519, %v519
  %v536 = vpack.c.b16 %v520, %v520
  %v537 = vpack.c.b16 %v521, %v521
  %v538 = vpack.c.b16 %v522, %v522
  %v539 = vpack.c.b16 %v523, %v523
  %v540 = vpack.c.b16 %v524, %v524
  %v541 = vpack.c.b16 %v525, %v525
  %v542 = vpack.c.b16 %v526, %v526
  %v543 = vpack.c.b16 %v527, %v527
  %v544 = vpack.c.b16 %v528, %v528
  %v545 = vpack.c.b16 %v529, %v529
  %v546 = vpack.c.b16 %v530, %v530
  %v547 = vpack.c.b16 %v531, %v531
  %v548 = vpack.c.b16 %v532, %v532
  %v549 = vpack.c.b16 %v533, %v533
  %vm566 = vcmask 257024
  %567 = vst.msk [vmem:[%s4] sm:$0xf] %vm566, %v534
  %568 = vst.msk [vmem:[%s4 + $0x4] sm:$0xf] %vm566, %v535
  %569 = vst.msk [vmem:[%s4 + $0x8] sm:$0xf] %vm566, %v536
  %570 = vst.msk [vmem:[%s4 + $0xc] sm:$0xf] %vm566, %v537
  %571 = vst.msk [vmem:[%s4 + $0x10] sm:$0xf] %vm566, %v538
  %572 = vst.msk [vmem:[%s4 + $0x14] sm:$0xf] %vm566, %v539
  %573 = vst.msk [vmem:[%s4 + $0x18] sm:$0xf] %vm566, %v540
  %574 = vst.msk [vmem:[%s4 + $0x1c] sm:$0xf] %vm566, %v541
  %575 = vst.msk [vmem:[%s4 + $0x20] sm:$0xf] %vm566, %v542
  %576 = vst.msk [vmem:[%s4 + $0x24] sm:$0xf] %vm566, %v543
  %577 = vst.msk [vmem:[%s4 + $0x28] sm:$0xf] %vm566, %v544
  %578 = vst.msk [vmem:[%s4 + $0x2c] sm:$0xf] %vm566, %v545
  %579 = vst.msk [vmem:[%s4 + $0x30] sm:$0xf] %vm566, %v546
  %580 = vst.msk [vmem:[%s4 + $0x34] sm:$0xf] %vm566, %v547
  %581 = vst.msk [vmem:[%s4 + $0x38] sm:$0xf] %vm566, %v548
  %582 = vst.msk [vmem:[%s4 + $0x3c] sm:$0xf] %vm566, %v549
  // Predicated region
  $region18: #{dqn_forward.3} parent=0 // pred_check
    _
  $region19: #{dqn_forward.3} parent=0 // pred_check_branch
    %584 = sbr.rel (0) target = $region21
  $region20: #{dqn_forward.3} parent=0 // pred_region
    _
  $region21: #{dqn_forward.3} parent=0 // pred_fallthru
    _
  // Predicated region
  $region22: #{dqn_forward.3} parent=0 // pred_check
    _
  $region23: #{dqn_forward.3} parent=0 // pred_check_branch
    %586 = sbr.rel (0) target = $region25
  $region24: #{dqn_forward.3} parent=0 // pred_region
    _
  $region25: #{dqn_forward.3} parent=0 // pred_fallthru
    _

// kernel: dqn_forward.4
$region0: #{dqn_forward.4}
  #allocation0 [shape = 'u32[]', space=smem, size = 0x4, offset = 0x4, fixed_abs, tag = 'smem constant byte address 0x4 - core index']
  #allocation1 [shape = 'u32[144,128]{1,0:T(1,128)}', space=vmem, size = 0x12000, scoped, tag = 'internal scratch']
  %s0 = inlined_call_operand.vmem [shape: bf16[18,512], index: 0, kind: input, shape index: {}]
  %s1 = inlined_call_operand.vmem [shape: bf16[512,64], index: 1, kind: input, shape index: {}]
  %s2 = inlined_call_operand.vmem [shape: f32[1,64], index: 2, kind: input, shape index: {}]
  %s3 = inlined_call_operand.vmem [shape: f32[1,64], index: 3, kind: input, shape index: {}]
  %s4 = inlined_call_operand.vmem [shape: bf16[18,64], index: 4, kind: output, shape index: {}]
  %s5 = sld [smem:[#allocation0]]
  $region26: #{dqn_forward.4} parent=0
    _
  %s7 = ssub.s32 1, %s5
  %s8 = scalar_select 0, %s7, %s5
  // Predicated region
  $region2: #{dqn_forward.4} parent=0 // pred_check
    _
  $region3: #{dqn_forward.4} parent=0 // pred_check_branch
    %10 = sbr.rel (0) target = $region5
  $region4: #{dqn_forward.4} parent=0 // pred_region
    _
  $region5: #{dqn_forward.4} parent=0 // pred_fallthru
    _
  // Predicated region
  $region6: #{dqn_forward.4} parent=0 // pred_check
    _
  $region7: #{dqn_forward.4} parent=0 // pred_check_branch
    %12 = sbr.rel (0) target = $region9
  $region8: #{dqn_forward.4} parent=0 // pred_region
    _
  $region9: #{dqn_forward.4} parent=0 // pred_fallthru
    _
  // Predicated region
  $region10: #{dqn_forward.4} parent=0 // pred_check
    _
  $region11: #{dqn_forward.4} parent=0 // pred_check_branch
    %14 = sbr.rel (0) target = $region13
  $region12: #{dqn_forward.4} parent=0 // pred_region
    _
  $region13: #{dqn_forward.4} parent=0 // pred_fallthru
    _
  // Predicated region
  $region14: #{dqn_forward.4} parent=0 // pred_check
    _
  $region15: #{dqn_forward.4} parent=0 // pred_check_branch
    %16 = sbr.rel (0) target = $region17
  $region16: #{dqn_forward.4} parent=0 // pred_region
    _
  $region17: #{dqn_forward.4} parent=0 // pred_fallthru
    _
  %v18 = vld [vmem:[%s0] sm:$0xff]
  %v19 = vld [vmem:[%s0 + $0x8] sm:$0xff]
  %v20 = vld [vmem:[%s0 + $0x10] sm:$0xff]
  %v21 = vld [vmem:[%s0 + $0x18] sm:$0xff]
  %v22 = vld [vmem:[%s0 + $0x20] sm:$0x11]
  %v23 = vld [vmem:[%s0 + $0x28] sm:$0x11]
  %v24 = vld [vmem:[%s1] sm:$0xf]
  %v25 = vld [vmem:[%s1 + $0x4] sm:$0xf]
  %v26 = vld [vmem:[%s1 + $0x8] sm:$0xf]
  %v27 = vld [vmem:[%s1 + $0xc] sm:$0xf]
  %v28 = vld [vmem:[%s1 + $0x10] sm:$0xf]
  %v29 = vld [vmem:[%s1 + $0x14] sm:$0xf]
  %v30 = vld [vmem:[%s1 + $0x18] sm:$0xf]
  %v31 = vld [vmem:[%s1 + $0x1c] sm:$0xf]
  %v32 = vld [vmem:[%s1 + $0x20] sm:$0xf]
  %v33 = vld [vmem:[%s1 + $0x24] sm:$0xf]
  %v34 = vld [vmem:[%s1 + $0x28] sm:$0xf]
  %v35 = vld [vmem:[%s1 + $0x2c] sm:$0xf]
  %v36 = vld [vmem:[%s1 + $0x30] sm:$0xf]
  %v37 = vld [vmem:[%s1 + $0x34] sm:$0xf]
  %v38 = vld [vmem:[%s1 + $0x38] sm:$0xf]
  %v39 = vld [vmem:[%s1 + $0x3c] sm:$0xf]
  %v40 = vld [vmem:[%s1 + $0x40] sm:$0xf]
  %v41 = vld [vmem:[%s1 + $0x44] sm:$0xf]
  %v42 = vld [vmem:[%s1 + $0x48] sm:$0xf]
  %v43 = vld [vmem:[%s1 + $0x4c] sm:$0xf]
  %v44 = vld [vmem:[%s1 + $0x50] sm:$0xf]
  %v45 = vld [vmem:[%s1 + $0x54] sm:$0xf]
  %v46 = vld [vmem:[%s1 + $0x58] sm:$0xf]
  %v47 = vld [vmem:[%s1 + $0x5c] sm:$0xf]
  %v48 = vld [vmem:[%s1 + $0x60] sm:$0xf]
  %v49 = vld [vmem:[%s1 + $0x64] sm:$0xf]
  %v50 = vld [vmem:[%s1 + $0x68] sm:$0xf]
  %v51 = vld [vmem:[%s1 + $0x6c] sm:$0xf]
  %v52 = vld [vmem:[%s1 + $0x70] sm:$0xf]
  %v53 = vld [vmem:[%s1 + $0x74] sm:$0xf]
  %v54 = vld [vmem:[%s1 + $0x78] sm:$0xf]
  %v55 = vld [vmem:[%s1 + $0x7c] sm:$0xf]
  %v56 = vld [vmem:[%s1 + $0x80] sm:$0xf]
  %v57 = vld [vmem:[%s1 + $0x84] sm:$0xf]
  %v58 = vld [vmem:[%s1 + $0x88] sm:$0xf]
  %v59 = vld [vmem:[%s1 + $0x8c] sm:$0xf]
  %v60 = vld [vmem:[%s1 + $0x90] sm:$0xf]
  %v61 = vld [vmem:[%s1 + $0x94] sm:$0xf]
  %v62 = vld [vmem:[%s1 + $0x98] sm:$0xf]
  %v63 = vld [vmem:[%s1 + $0x9c] sm:$0xf]
  %v64 = vld [vmem:[%s1 + $0xa0] sm:$0xf]
  %v65 = vld [vmem:[%s1 + $0xa4] sm:$0xf]
  %v66 = vld [vmem:[%s1 + $0xa8] sm:$0xf]
  %v67 = vld [vmem:[%s1 + $0xac] sm:$0xf]
  %v68 = vld [vmem:[%s1 + $0xb0] sm:$0xf]
  %v69 = vld [vmem:[%s1 + $0xb4] sm:$0xf]
  %v70 = vld [vmem:[%s1 + $0xb8] sm:$0xf]
  %v71 = vld [vmem:[%s1 + $0xbc] sm:$0xf]
  %v72 = vld [vmem:[%s1 + $0xc0] sm:$0xf]
  %v73 = vld [vmem:[%s1 + $0xc4] sm:$0xf]
  %v74 = vld [vmem:[%s1 + $0xc8] sm:$0xf]
  %v75 = vld [vmem:[%s1 + $0xcc] sm:$0xf]
  %v76 = vld [vmem:[%s1 + $0xd0] sm:$0xf]
  %v77 = vld [vmem:[%s1 + $0xd4] sm:$0xf]
  %v78 = vld [vmem:[%s1 + $0xd8] sm:$0xf]
  %v79 = vld [vmem:[%s1 + $0xdc] sm:$0xf]
  %v80 = vld [vmem:[%s1 + $0xe0] sm:$0xf]
  %v81 = vld [vmem:[%s1 + $0xe4] sm:$0xf]
  %v82 = vld [vmem:[%s1 + $0xe8] sm:$0xf]
  %v83 = vld [vmem:[%s1 + $0xec] sm:$0xf]
  %v84 = vld [vmem:[%s1 + $0xf0] sm:$0xf]
  %v85 = vld [vmem:[%s1 + $0xf4] sm:$0xf]
  %v86 = vld [vmem:[%s1 + $0xf8] sm:$0xf]
  %v87 = vld [vmem:[%s1 + $0xfc] sm:$0xf]
  %v94 = vunpack.c.l.b16 %v18
  %v95 = vunpack.c.h.b16 %v18
  %v96 = vunpack.c.l.b16 %v19
  %v97 = vunpack.c.h.b16 %v19
  %v98 = vunpack.c.l.b16 %v20
  %v99 = vunpack.c.h.b16 %v20
  %v100 = vunpack.c.l.b16 %v21
  %v101 = vunpack.c.h.b16 %v21
  %v102 = vunpack.c.l.b16 %v22
  %v103 = vunpack.c.h.b16 %v22
  %v104 = vunpack.c.l.b16 %v23
  %v105 = vunpack.c.h.b16 %v23
  %v106 = vpack.c.b16 %v98, %v94
  %v107 = vpack.c.b16 %v99, %v95
  %v108 = vpack.c.b16 %v100, %v96
  %v109 = vpack.c.b16 %v101, %v97
  %v110 = vpack.c.b16 %v102, %v102
  %v111 = vpack.c.b16 %v103, %v103
  %v112 = vpack.c.b16 %v104, %v104
  %v113 = vpack.c.b16 %v105, %v105
  %v186 = vunpack.c.l.b16 %v24
  %v187 = vunpack.c.l.b16 %v25
  %v188 = vunpack.c.l.b16 %v26
  %v189 = vunpack.c.l.b16 %v27
  %v190 = vunpack.c.l.b16 %v28
  %v191 = vunpack.c.l.b16 %v29
  %v192 = vunpack.c.l.b16 %v30
  %v193 = vunpack.c.l.b16 %v31
  %v194 = vunpack.c.l.b16 %v32
  %v195 = vunpack.c.l.b16 %v33
  %v196 = vunpack.c.l.b16 %v34
  %v197 = vunpack.c.l.b16 %v35
  %v198 = vunpack.c.l.b16 %v36
  %v199 = vunpack.c.l.b16 %v37
  %v200 = vunpack.c.l.b16 %v38
  %v201 = vunpack.c.l.b16 %v39
  %v202 = vunpack.c.l.b16 %v40
  %v203 = vunpack.c.l.b16 %v41
  %v204 = vunpack.c.l.b16 %v42
  %v205 = vunpack.c.l.b16 %v43
  %v206 = vunpack.c.l.b16 %v44
  %v207 = vunpack.c.l.b16 %v45
  %v208 = vunpack.c.l.b16 %v46
  %v209 = vunpack.c.l.b16 %v47
  %v210 = vunpack.c.l.b16 %v48
  %v211 = vunpack.c.l.b16 %v49
  %v212 = vunpack.c.l.b16 %v50
  %v213 = vunpack.c.l.b16 %v51
  %v214 = vunpack.c.l.b16 %v52
  %v215 = vunpack.c.l.b16 %v53
  %v216 = vunpack.c.l.b16 %v54
  %v217 = vunpack.c.l.b16 %v55
  %v218 = vunpack.c.l.b16 %v56
  %v219 = vunpack.c.l.b16 %v57
  %v220 = vunpack.c.l.b16 %v58
  %v221 = vunpack.c.l.b16 %v59
  %v222 = vunpack.c.l.b16 %v60
  %v223 = vunpack.c.l.b16 %v61
  %v224 = vunpack.c.l.b16 %v62
  %v225 = vunpack.c.l.b16 %v63
  %v226 = vunpack.c.l.b16 %v64
  %v227 = vunpack.c.l.b16 %v65
  %v228 = vunpack.c.l.b16 %v66
  %v229 = vunpack.c.l.b16 %v67
  %v230 = vunpack.c.l.b16 %v68
  %v231 = vunpack.c.l.b16 %v69
  %v232 = vunpack.c.l.b16 %v70
  %v233 = vunpack.c.l.b16 %v71
  %v234 = vunpack.c.l.b16 %v72
  %v235 = vunpack.c.l.b16 %v73
  %v236 = vunpack.c.l.b16 %v74
  %v237 = vunpack.c.l.b16 %v75
  %v238 = vunpack.c.l.b16 %v76
  %v239 = vunpack.c.l.b16 %v77
  %v240 = vunpack.c.l.b16 %v78
  %v241 = vunpack.c.l.b16 %v79
  %v242 = vunpack.c.l.b16 %v80
  %v243 = vunpack.c.l.b16 %v81
  %v244 = vunpack.c.l.b16 %v82
  %v245 = vunpack.c.l.b16 %v83
  %v246 = vunpack.c.l.b16 %v84
  %v247 = vunpack.c.l.b16 %v85
  %v248 = vunpack.c.l.b16 %v86
  %v249 = vunpack.c.l.b16 %v87
  %v250 = vpack.c.b16 %v187, %v186
  %v251 = vpack.c.b16 %v189, %v188
  %v252 = vpack.c.b16 %v191, %v190
  %v253 = vpack.c.b16 %v193, %v192
  %v254 = vpack.c.b16 %v195, %v194
  %v255 = vpack.c.b16 %v197, %v196
  %v256 = vpack.c.b16 %v199, %v198
  %v257 = vpack.c.b16 %v201, %v200
  %v258 = vpack.c.b16 %v203, %v202
  %v259 = vpack.c.b16 %v205, %v204
  %v260 = vpack.c.b16 %v207, %v206
  %v261 = vpack.c.b16 %v209, %v208
  %v262 = vpack.c.b16 %v211, %v210
  %v263 = vpack.c.b16 %v213, %v212
  %v264 = vpack.c.b16 %v215, %v214
  %v265 = vpack.c.b16 %v217, %v216
  %v266 = vpack.c.b16 %v219, %v218
  %v267 = vpack.c.b16 %v221, %v220
  %v268 = vpack.c.b16 %v223, %v222
  %v269 = vpack.c.b16 %v225, %v224
  %v270 = vpack.c.b16 %v227, %v226
  %v271 = vpack.c.b16 %v229, %v228
  %v272 = vpack.c.b16 %v231, %v230
  %v273 = vpack.c.b16 %v233, %v232
  %v274 = vpack.c.b16 %v235, %v234
  %v275 = vpack.c.b16 %v237, %v236
  %v276 = vpack.c.b16 %v239, %v238
  %v277 = vpack.c.b16 %v241, %v240
  %v278 = vpack.c.b16 %v243, %v242
  %v279 = vpack.c.b16 %v245, %v244
  %v280 = vpack.c.b16 %v247, %v246
  %v281 = vpack.c.b16 %v249, %v248
  %314 = vmatprep.subr.bf16.mxu0 0
  %315 = vmatpush1.bf16.msra.mxu0 %v250
  %316 = vmatprep.subr.bf16.mxu0 0
  %317 = vmatpush1.bf16.msra.mxu0 %v251
  %318 = vmatprep.subr.bf16.mxu0 0
  %319 = vmatpush1.bf16.msra.mxu0 %v252
  %320 = vmatprep.subr.bf16.mxu0 0
  %321 = vmatpush1.bf16.msra.mxu0 %v253
  %322 = vmatprep.subr.bf16.mxu0 0
  %323 = vmatpush1.bf16.msra.mxu0 %v254
  %324 = vmatprep.subr.bf16.mxu0 0
  %325 = vmatpush1.bf16.msra.mxu0 %v255
  %326 = vmatprep.subr.bf16.mxu0 0
  %327 = vmatpush1.bf16.msra.mxu0 %v256
  %328 = vmatprep.subr.bf16.mxu0 0
  %329 = vmatpush1.bf16.msra.mxu0 %v257
  %330 = vmatprep.subr.bf16.mxu0 0
  %331 = vmatpush1.bf16.msra.mxu0 %v258
  %332 = vmatprep.subr.bf16.mxu0 0
  %333 = vmatpush1.bf16.msra.mxu0 %v259
  %334 = vmatprep.subr.bf16.mxu0 0
  %335 = vmatpush1.bf16.msra.mxu0 %v260
  %336 = vmatprep.subr.bf16.mxu0 0
  %337 = vmatpush1.bf16.msra.mxu0 %v261
  %338 = vmatprep.subr.bf16.mxu0 0
  %339 = vmatpush1.bf16.msra.mxu0 %v262
  %340 = vmatprep.subr.bf16.mxu0 0
  %341 = vmatpush1.bf16.msra.mxu0 %v263
  %342 = vmatprep.subr.bf16.mxu0 0
  %343 = vmatpush1.bf16.msra.mxu0 %v264
  %344 = vmatprep.subr.bf16.mxu0 0
  %345 = vmatpush1.bf16.msra.mxu0 %v265
  %346 = vmatprep.mubr.bf16.mxu0 %v107
  %347 = vmatmul.mubr.bf16.gmra.mrb[0].mxu0 %v106
  %v348 = vpop.f32.mrb[0].mxu0
  %v349 = vadd.f32 0.0, %v348
  %v350 = vpop.f32.mrb[0].mxu0
  %v351 = vpop.f32.mrb[0].mxu0
  %v352 = vadd.f32 0.0, %v351
  %v353 = vpop.f32.mrb[0].mxu0
  %354 = vmatprep.mubr.bf16.mxu0 %v111
  %355 = vmatmul.mubr.bf16.gmra.mrb[0].mxu0 %v110
  %v356 = vpop.f32.mrb[0].mxu0
  %v357 = vadd.f32 0.0, %v356
  %v358 = vpop.f32.mrb[0].mxu0
  %v359 = vpop.f32.mrb[0].mxu0
  %v360 = vpop.f32.mrb[0].mxu0
  %361 = vdwg.mxu0
  %362 = vmatprep.subr.bf16.mxu0 0
  %363 = vmatpush1.bf16.msra.mxu0 %v266
  %364 = vmatprep.subr.bf16.mxu0 0
  %365 = vmatpush1.bf16.msra.mxu0 %v267
  %366 = vmatprep.subr.bf16.mxu0 0
  %367 = vmatpush1.bf16.msra.mxu0 %v268
  %368 = vmatprep.subr.bf16.mxu0 0
  %369 = vmatpush1.bf16.msra.mxu0 %v269
  %370 = vmatprep.subr.bf16.mxu0 0
  %371 = vmatpush1.bf16.msra.mxu0 %v270
  %372 = vmatprep.subr.bf16.mxu0 0
  %373 = vmatpush1.bf16.msra.mxu0 %v271
  %374 = vmatprep.subr.bf16.mxu0 0
  %375 = vmatpush1.bf16.msra.mxu0 %v272
  %376 = vmatprep.subr.bf16.mxu0 0
  %377 = vmatpush1.bf16.msra.mxu0 %v273
  %378 = vmatprep.subr.bf16.mxu0 0
  %379 = vmatpush1.bf16.msra.mxu0 %v274
  %380 = vmatprep.subr.bf16.mxu0 0
  %381 = vmatpush1.bf16.msra.mxu0 %v275
  %382 = vmatprep.subr.bf16.mxu0 0
  %383 = vmatpush1.bf16.msra.mxu0 %v276
  %384 = vmatprep.subr.bf16.mxu0 0
  %385 = vmatpush1.bf16.msra.mxu0 %v277
  %386 = vmatprep.subr.bf16.mxu0 0
  %387 = vmatpush1.bf16.msra.mxu0 %v278
  %388 = vmatprep.subr.bf16.mxu0 0
  %389 = vmatpush1.bf16.msra.mxu0 %v279
  %390 = vmatprep.subr.bf16.mxu0 0
  %391 = vmatpush1.bf16.msra.mxu0 %v280
  %392 = vmatprep.subr.bf16.mxu0 0
  %393 = vmatpush1.bf16.msra.mxu0 %v281
  %394 = vmatprep.mubr.bf16.mxu0 %v109
  %395 = vmatmul.mubr.bf16.gmra.mrb[0].mxu0 %v108
  %v396 = vpop.f32.mrb[0].mxu0
  %v397 = vadd.f32 %v349, %v396
  %v398 = vpop.f32.mrb[0].mxu0
  %v399 = vpop.f32.mrb[0].mxu0
  %v400 = vadd.f32 %v352, %v399
  %v401 = vpop.f32.mrb[0].mxu0
  %402 = vmatprep.mubr.bf16.mxu0 %v113
  %403 = vmatmul.mubr.bf16.gmra.mrb[0].mxu0 %v112
  %v404 = vpop.f32.mrb[0].mxu0
  %v405 = vadd.f32 %v357, %v404
  %v406 = vpop.f32.mrb[0].mxu0
  %v407 = vpop.f32.mrb[0].mxu0
  %v408 = vpop.f32.mrb[0].mxu0
  %409 = vdwg.mxu0
  %vm410 = vcmask 523264
  %v411 = vsel %vm410, %v397, 0.0
  %v412 = vsel %vm410, %v400, 0.0
  %v413 = vadd.f32 %v411, %v412
  %vm414 = vcmask 517120
  %v415 = vsel %vm414, %v405, 0.0
  %v416 = vadd.f32 %v413, %v415
  %v417 = vrot.slane %v416, 4
  %v418 = vadd.f32 %v416, %v417
  %v419 = vrot.slane %v418, 2
  %v420 = vadd.f32 %v418, %v419
  %v421 = vrot.slane %v420, 1
  %v422 = vadd.f32 %v420, %v421
  %v423 = vmul.f32 %v422, 0.055555556
  %v424 = vmul.f32 %v397, %v397
  %v425 = vmul.f32 %v400, %v400
  %v426 = vmul.f32 %v405, %v405
  %v427 = vsel %vm410, %v424, 0.0
  %v428 = vsel %vm410, %v425, 0.0
  %v429 = vadd.f32 %v427, %v428
  %v430 = vsel %vm414, %v426, 0.0
  %v431 = vadd.f32 %v429, %v430
  %v432 = vrot.slane %v431, 4
  %v433 = vadd.f32 %v431, %v432
  %v434 = vrot.slane %v433, 2
  %v435 = vadd.f32 %v433, %v434
  %v436 = vrot.slane %v435, 1
  %v437 = vadd.f32 %v435, %v436
  %v438 = vmul.f32 %v437, 0.055555556
  %v439 = vmul.f32 %v423, %v423
  %v440 = vsub.f32 %v438, %v439
  %v441 = vmax.f32 %v440, 0.0
  %v442 = vld [vmem:[%s2] sm:$0x1]
  %v443 = vadd.f32 %v441, 1e-05
  %v444 = vrsqrt.pop %v443
  %v445 = vmul.f32 %v442, %v444
  %v446 = vld [vmem:[%s3] sm:$0x1]
  %v447 = vmul.f32 %v423, %v445
  %v448 = vsub.f32 %v446, %v447
  %v450 = vlaneseq
  %v451 = vshrl.u32 %v450, 7
  %v452 = vsub.s32 0, %v451
  %v453 = vrot.slane %v445, %v452
  %v455 = vmul.f32 %v397, %v453
  %v456 = vmul.f32 %v400, %v453
  %v457 = vmul.f32 %v405, %v453
  %v459 = vlaneseq
  %v460 = vshrl.u32 %v459, 7
  %v461 = vsub.s32 0, %v460
  %v462 = vrot.slane %v448, %v461
  %v464 = vadd.f32 %v455, %v462
  %v465 = vadd.f32 %v456, %v462
  %v466 = vadd.f32 %v457, %v462
  %v467 = vmax.f32 %v464, 0.0
  %v468 = vmax.f32 %v465, 0.0
  %v469 = vmax.f32 %v466, 0.0
  %v470 = vpack.c.bf16 %v468, %v467
  %v471 = vpack.c.bf16 %v469, %v469
  %v474 = vunpack.c.l.b16 %v470
  %v475 = vunpack.c.h.b16 %v470
  %v476 = vunpack.c.l.b16 %v471
  %v477 = vpack.c.b16 %v474, %v474
  %v478 = vpack.c.b16 %v475, %v475
  %v479 = vpack.c.b16 %v476, %v476
  %vm483 = vcmask 519168
  %484 = vst.msk [vmem:[%s4] sm:$0xf] %vm483, %v477
  %485 = vst.msk [vmem:[%s4 + $0x4] sm:$0xf] %vm483, %v478
  %vm486 = vcmask 516096
  %487 = vst.msk [vmem:[%s4 + $0x8] sm:$0x1] %vm486, %v479
  // Predicated region
  $region18: #{dqn_forward.4} parent=0 // pred_check
    _
  $region19: #{dqn_forward.4} parent=0 // pred_check_branch
    %489 = sbr.rel (0) target = $region21
  $region20: #{dqn_forward.4} parent=0 // pred_region
    _
  $region21: #{dqn_forward.4} parent=0 // pred_fallthru
    _
  // Predicated region
  $region22: #{dqn_forward.4} parent=0 // pred_check
    _
  $region23: #{dqn_forward.4} parent=0 // pred_check_branch
    %491 = sbr.rel (0) target = $region25
  $region24: #{dqn_forward.4} parent=0 // pred_region
    _
  $region25: #{dqn_forward.4} parent=0 // pred_fallthru
    _

// kernel: dqn_forward.5
$region0: #{dqn_forward.5}
  #allocation0 [shape = 'u32[]', space=smem, size = 0x4, offset = 0x4, fixed_abs, tag = 'smem constant byte address 0x4 - core index']
  #allocation1 [shape = 'u32[144,128]{1,0:T(1,128)}', space=vmem, size = 0x12000, scoped, tag = 'internal scratch']
  %s0 = inlined_call_operand.vmem [shape: bf16[2,576], index: 0, kind: input, shape index: {}]
  %s1 = inlined_call_operand.vmem [shape: bf16[576,64], index: 1, kind: input, shape index: {}]
  %s2 = inlined_call_operand.vmem [shape: f32[1,64], index: 2, kind: input, shape index: {}]
  %s3 = inlined_call_operand.vmem [shape: f32[1,64], index: 3, kind: input, shape index: {}]
  %s4 = inlined_call_operand.vmem [shape: bf16[64,512], index: 4, kind: input, shape index: {}]
  %s5 = inlined_call_operand.vmem [shape: f32[1,512], index: 5, kind: input, shape index: {}]
  %s6 = inlined_call_operand.vmem [shape: bf16[512,6], index: 6, kind: input, shape index: {}]
  %s7 = inlined_call_operand.vmem [shape: f32[1,6], index: 7, kind: input, shape index: {}]
  %s8 = inlined_call_operand.hbm [shape: f32[2,6], index: 8, kind: output, shape index: {}]
  %s9 = sld [smem:[#allocation0]]
  $region42: #{dqn_forward.5} parent=0
    _
  %s11 = ssub.s32 1, %s9
  %s12 = scalar_select 0, %s11, %s9
  $region1: #{dqn_forward.5} parent=0
    #allocation2 [shape = 'u8[1024]{0}', space=vmem, size = 0x400, scoped, tag = 'output window, operand 0, single buffered']
    #allocation3 [shape = 's32[1]{0}', space=sflag, size = 0x4, scoped, tag = 'scoped memory for dqn_forward.5']
    %13 = vsyncpa [#allocation3], 0
    // Predicated region
    $region2: #{dqn_forward.5} parent=1 // pred_check
      _
    $region3: #{dqn_forward.5} parent=1 // pred_check_branch
      %15 = sbr.rel (0) target = $region5
    $region4: #{dqn_forward.5} parent=1 // pred_region
      _
    $region5: #{dqn_forward.5} parent=1 // pred_fallthru
      _
    // Predicated region
    $region6: #{dqn_forward.5} parent=1 // pred_check
      _
    $region7: #{dqn_forward.5} parent=1 // pred_check_branch
      %17 = sbr.rel (0) target = $region9
    $region8: #{dqn_forward.5} parent=1 // pred_region
      _
    $region9: #{dqn_forward.5} parent=1 // pred_fallthru
      _
    // Predicated region
    $region10: #{dqn_forward.5} parent=1 // pred_check
      _
    $region11: #{dqn_forward.5} parent=1 // pred_check_branch
      %19 = sbr.rel (0) target = $region13
    $region12: #{dqn_forward.5} parent=1 // pred_region
      _
    $region13: #{dqn_forward.5} parent=1 // pred_fallthru
      _
    // Predicated region
    $region14: #{dqn_forward.5} parent=1 // pred_check
      _
    $region15: #{dqn_forward.5} parent=1 // pred_check_branch
      %21 = sbr.rel (0) target = $region17
    $region16: #{dqn_forward.5} parent=1 // pred_region
      _
    $region17: #{dqn_forward.5} parent=1 // pred_fallthru
      _
    // Predicated region
    $region18: #{dqn_forward.5} parent=1 // pred_check
      _
    $region19: #{dqn_forward.5} parent=1 // pred_check_branch
      %23 = sbr.rel (0) target = $region21
    $region20: #{dqn_forward.5} parent=1 // pred_region
      _
    $region21: #{dqn_forward.5} parent=1 // pred_fallthru
      _
    // Predicated region
    $region22: #{dqn_forward.5} parent=1 // pred_check
      _
    $region23: #{dqn_forward.5} parent=1 // pred_check_branch
      %25 = sbr.rel (0) target = $region25
    $region24: #{dqn_forward.5} parent=1 // pred_region
      _
    $region25: #{dqn_forward.5} parent=1 // pred_fallthru
      _
    // Predicated region
    $region26: #{dqn_forward.5} parent=1 // pred_check
      _
    $region27: #{dqn_forward.5} parent=1 // pred_check_branch
      %27 = sbr.rel (0) target = $region29
    $region28: #{dqn_forward.5} parent=1 // pred_region
      _
    $region29: #{dqn_forward.5} parent=1 // pred_fallthru
      _
    // Predicated region
    $region30: #{dqn_forward.5} parent=1 // pred_check
      _
    $region31: #{dqn_forward.5} parent=1 // pred_check_branch
      %29 = sbr.rel (0) target = $region33
    $region32: #{dqn_forward.5} parent=1 // pred_region
      _
    $region33: #{dqn_forward.5} parent=1 // pred_fallthru
      _
    %v31 = vld [vmem:[%s0] sm:$0x1f]
    %v32 = vld [vmem:[%s1] sm:$0xf]
    %v33 = vld [vmem:[%s1 + $0x4] sm:$0xf]
    %v34 = vld [vmem:[%s1 + $0x8] sm:$0xf]
    %v35 = vld [vmem:[%s1 + $0xc] sm:$0xf]
    %v36 = vld [vmem:[%s1 + $0x10] sm:$0xf]
    %v37 = vld [vmem:[%s1 + $0x14] sm:$0xf]
    %v38 = vld [vmem:[%s1 + $0x18] sm:$0xf]
    %v39 = vld [vmem:[%s1 + $0x1c] sm:$0xf]
    %v40 = vld [vmem:[%s1 + $0x20] sm:$0xf]
    %v41 = vld [vmem:[%s1 + $0x24] sm:$0xf]
    %v42 = vld [vmem:[%s1 + $0x28] sm:$0xf]
    %v43 = vld [vmem:[%s1 + $0x2c] sm:$0xf]
    %v44 = vld [vmem:[%s1 + $0x30] sm:$0xf]
    %v45 = vld [vmem:[%s1 + $0x34] sm:$0xf]
    %v46 = vld [vmem:[%s1 + $0x38] sm:$0xf]
    %v47 = vld [vmem:[%s1 + $0x3c] sm:$0xf]
    %v48 = vld [vmem:[%s1 + $0x40] sm:$0xf]
    %v49 = vld [vmem:[%s1 + $0x44] sm:$0xf]
    %v50 = vld [vmem:[%s1 + $0x48] sm:$0xf]
    %v51 = vld [vmem:[%s1 + $0x4c] sm:$0xf]
    %v52 = vld [vmem:[%s1 + $0x50] sm:$0xf]
    %v53 = vld [vmem:[%s1 + $0x54] sm:$0xf]
    %v54 = vld [vmem:[%s1 + $0x58] sm:$0xf]
    %v55 = vld [vmem:[%s1 + $0x5c] sm:$0xf]
    %v56 = vld [vmem:[%s1 + $0x60] sm:$0xf]
    %v57 = vld [vmem:[%s1 + $0x64] sm:$0xf]
    %v58 = vld [vmem:[%s1 + $0x68] sm:$0xf]
    %v59 = vld [vmem:[%s1 + $0x6c] sm:$0xf]
    %v60 = vld [vmem:[%s1 + $0x70] sm:$0xf]
    %v61 = vld [vmem:[%s1 + $0x74] sm:$0xf]
    %v62 = vld [vmem:[%s1 + $0x78] sm:$0xf]
    %v63 = vld [vmem:[%s1 + $0x7c] sm:$0xf]
    %v64 = vld [vmem:[%s1 + $0x80] sm:$0xf]
    %v65 = vld [vmem:[%s1 + $0x84] sm:$0xf]
    %v66 = vld [vmem:[%s1 + $0x88] sm:$0xf]
    %v67 = vld [vmem:[%s1 + $0x8c] sm:$0xf]
    %v68 = vld [vmem:[%s1 + $0x90] sm:$0xf]
    %v69 = vld [vmem:[%s1 + $0x94] sm:$0xf]
    %v70 = vld [vmem:[%s1 + $0x98] sm:$0xf]
    %v71 = vld [vmem:[%s1 + $0x9c] sm:$0xf]
    %v72 = vld [vmem:[%s1 + $0xa0] sm:$0xf]
    %v73 = vld [vmem:[%s1 + $0xa4] sm:$0xf]
    %v74 = vld [vmem:[%s1 + $0xa8] sm:$0xf]
    %v75 = vld [vmem:[%s1 + $0xac] sm:$0xf]
    %v76 = vld [vmem:[%s1 + $0xb0] sm:$0xf]
    %v77 = vld [vmem:[%s1 + $0xb4] sm:$0xf]
    %v78 = vld [vmem:[%s1 + $0xb8] sm:$0xf]
    %v79 = vld [vmem:[%s1 + $0xbc] sm:$0xf]
    %v80 = vld [vmem:[%s1 + $0xc0] sm:$0xf]
    %v81 = vld [vmem:[%s1 + $0xc4] sm:$0xf]
    %v82 = vld [vmem:[%s1 + $0xc8] sm:$0xf]
    %v83 = vld [vmem:[%s1 + $0xcc] sm:$0xf]
    %v84 = vld [vmem:[%s1 + $0xd0] sm:$0xf]
    %v85 = vld [vmem:[%s1 + $0xd4] sm:$0xf]
    %v86 = vld [vmem:[%s1 + $0xd8] sm:$0xf]
    %v87 = vld [vmem:[%s1 + $0xdc] sm:$0xf]
    %v88 = vld [vmem:[%s1 + $0xe0] sm:$0xf]
    %v89 = vld [vmem:[%s1 + $0xe4] sm:$0xf]
    %v90 = vld [vmem:[%s1 + $0xe8] sm:$0xf]
    %v91 = vld [vmem:[%s1 + $0xec] sm:$0xf]
    %v92 = vld [vmem:[%s1 + $0xf0] sm:$0xf]
    %v93 = vld [vmem:[%s1 + $0xf4] sm:$0xf]
    %v94 = vld [vmem:[%s1 + $0xf8] sm:$0xf]
    %v95 = vld [vmem:[%s1 + $0xfc] sm:$0xf]
    %v96 = vld [vmem:[%s1 + $0x100] sm:$0xf]
    %v97 = vld [vmem:[%s1 + $0x104] sm:$0xf]
    %v98 = vld [vmem:[%s1 + $0x108] sm:$0xf]
    %v99 = vld [vmem:[%s1 + $0x10c] sm:$0xf]
    %v100 = vld [vmem:[%s1 + $0x110] sm:$0xf]
    %v101 = vld [vmem:[%s1 + $0x114] sm:$0xf]
    %v102 = vld [vmem:[%s1 + $0x118] sm:$0xf]
    %v103 = vld [vmem:[%s1 + $0x11c] sm:$0xf]
    %v105 = vcombine.high %v31, %v31
    %v107 = vunpack.c.l.s4 1966171168
    %v108 = vunpack.c.0.s8 %v107
    %v109 = vlaneseq
    %v110 = vshrl.u32 %v109, 7
    %v111 = vsub.s32 %v108, %v110
    %v112 = vrot.slane %v31, %v111
    %v114 = vunpack.c.l.s4 1966171168
    %v115 = vunpack.c.0.s8 %v114
    %v116 = vlaneseq
    %v117 = vshrl.u32 %v116, 7
    %v118 = vsub.s32 %v115, %v117
    %v119 = vrot.slane %v105, %v118
    %v120 = vcombine.high %v112, %v112
    %v122 = vunpack.c.l.s4 1966171168
    %v123 = vunpack.c.0.s8 %v122
    %v124 = vlaneseq
    %v125 = vshrl.u32 %v124, 7
    %v126 = vsub.s32 %v123, %v125
    %v127 = vrot.slane %v112, %v126
    %v129 = vunpack.c.l.s4 1966171168
    %v130 = vunpack.c.0.s8 %v129
    %v131 = vlaneseq
    %v132 = vshrl.u32 %v131, 7
    %v133 = vsub.s32 %v130, %v132
    %v134 = vrot.slane %v119, %v133
    %v136 = vunpack.c.l.s4 1966171168
    %v137 = vunpack.c.0.s8 %v136
    %v138 = vlaneseq
    %v139 = vshrl.u32 %v138, 7
    %v140 = vsub.s32 %v137, %v139
    %v141 = vrot.slane %v120, %v140
    %v142 = vcombine.high %v127, %v127
    %v143 = vcombine.high %v141, %v141
    %v220 = vunpack.c.l.b16 %v32
    %v221 = vunpack.c.l.b16 %v33
    %v222 = vunpack.c.l.b16 %v34
    %v223 = vunpack.c.l.b16 %v35
    %v224 = vunpack.c.l.b16 %v36
    %v225 = vunpack.c.l.b16 %v37
    %v226 = vunpack.c.l.b16 %v38
    %v227 = vunpack.c.l.b16 %v39
    %v228 = vunpack.c.l.b16 %v40
    %v229 = vunpack.c.l.b16 %v41
    %v230 = vunpack.c.l.b16 %v42
    %v231 = vunpack.c.l.b16 %v43
    %v232 = vunpack.c.l.b16 %v44
    %v233 = vunpack.c.l.b16 %v45
    %v234 = vunpack.c.l.b16 %v46
    %v235 = vunpack.c.l.b16 %v47
    %v236 = vunpack.c.l.b16 %v48
    %v237 = vunpack.c.l.b16 %v49
    %v238 = vunpack.c.l.b16 %v50
    %v239 = vunpack.c.l.b16 %v51
    %v240 = vunpack.c.l.b16 %v52
    %v241 = vunpack.c.l.b16 %v53
    %v242 = vunpack.c.l.b16 %v54
    %v243 = vunpack.c.l.b16 %v55
    %v244 = vunpack.c.l.b16 %v56
    %v245 = vunpack.c.l.b16 %v57
    %v246 = vunpack.c.l.b16 %v58
    %v247 = vunpack.c.l.b16 %v59
    %v248 = vunpack.c.l.b16 %v60
    %v249 = vunpack.c.l.b16 %v61
    %v250 = vunpack.c.l.b16 %v62
    %v251 = vunpack.c.l.b16 %v63
    %v252 = vunpack.c.l.b16 %v64
    %v253 = vunpack.c.l.b16 %v65
    %v254 = vunpack.c.l.b16 %v66
    %v255 = vunpack.c.l.b16 %v67
    %v256 = vunpack.c.l.b16 %v68
    %v257 = vunpack.c.l.b16 %v69
    %v258 = vunpack.c.l.b16 %v70
    %v259 = vunpack.c.l.b16 %v71
    %v260 = vunpack.c.l.b16 %v72
    %v261 = vunpack.c.l.b16 %v73
    %v262 = vunpack.c.l.b16 %v74
    %v263 = vunpack.c.l.b16 %v75
    %v264 = vunpack.c.l.b16 %v76
    %v265 = vunpack.c.l.b16 %v77
    %v266 = vunpack.c.l.b16 %v78
    %v267 = vunpack.c.l.b16 %v79
    %v268 = vunpack.c.l.b16 %v80
    %v269 = vunpack.c.l.b16 %v81
    %v270 = vunpack.c.l.b16 %v82
    %v271 = vunpack.c.l.b16 %v83
    %v272 = vunpack.c.l.b16 %v84
    %v273 = vunpack.c.l.b16 %v85
    %v274 = vunpack.c.l.b16 %v86
    %v275 = vunpack.c.l.b16 %v87
    %v276 = vunpack.c.l.b16 %v88
    %v277 = vunpack.c.l.b16 %v89
    %v278 = vunpack.c.l.b16 %v90
    %v279 = vunpack.c.l.b16 %v91
    %v280 = vunpack.c.l.b16 %v92
    %v281 = vunpack.c.l.b16 %v93
    %v282 = vunpack.c.l.b16 %v94
    %v283 = vunpack.c.l.b16 %v95
    %v284 = vunpack.c.l.b16 %v96
    %v285 = vunpack.c.l.b16 %v97
    %v286 = vunpack.c.l.b16 %v98
    %v287 = vunpack.c.l.b16 %v99
    %v288 = vunpack.c.l.b16 %v100
    %v289 = vunpack.c.l.b16 %v101
    %v290 = vunpack.c.l.b16 %v102
    %v291 = vunpack.c.l.b16 %v103
    %v292 = vpack.c.b16 %v221, %v220
    %v293 = vpack.c.b16 %v223, %v222
    %v294 = vpack.c.b16 %v225, %v224
    %v295 = vpack.c.b16 %v227, %v226
    %v296 = vpack.c.b16 %v229, %v228
    %v297 = vpack.c.b16 %v231, %v230
    %v298 = vpack.c.b16 %v233, %v232
    %v299 = vpack.c.b16 %v235, %v234
    %v300 = vpack.c.b16 %v237, %v236
    %v301 = vpack.c.b16 %v239, %v238
    %v302 = vpack.c.b16 %v241, %v240
    %v303 = vpack.c.b16 %v243, %v242
    %v304 = vpack.c.b16 %v245, %v244
    %v305 = vpack.c.b16 %v247, %v246
    %v306 = vpack.c.b16 %v249, %v248
    %v307 = vpack.c.b16 %v251, %v250
    %v308 = vpack.c.b16 %v253, %v252
    %v309 = vpack.c.b16 %v255, %v254
    %v310 = vpack.c.b16 %v257, %v256
    %v311 = vpack.c.b16 %v259, %v258
    %v312 = vpack.c.b16 %v261, %v260
    %v313 = vpack.c.b16 %v263, %v262
    %v314 = vpack.c.b16 %v265, %v264
    %v315 = vpack.c.b16 %v267, %v266
    %v316 = vpack.c.b16 %v269, %v268
    %v317 = vpack.c.b16 %v271, %v270
    %v318 = vpack.c.b16 %v273, %v272
    %v319 = vpack.c.b16 %v275, %v274
    %v320 = vpack.c.b16 %v277, %v276
    %v321 = vpack.c.b16 %v279, %v278
    %v322 = vpack.c.b16 %v281, %v280
    %v323 = vpack.c.b16 %v283, %v282
    %v324 = vpack.c.b16 %v285, %v284
    %v325 = vpack.c.b16 %v287, %v286
    %v326 = vpack.c.b16 %v289, %v288
    %v327 = vpack.c.b16 %v291, %v290
    %vm364 = vcmask 523264
    %v366 = vsel %vm364, %v134, 0
    %368 = vmatprep.subr.bf16.mxu0 0
    %369 = vmatpush1.bf16.msra.mxu0 %v292
    %370 = vmatprep.subr.bf16.mxu0 0
    %371 = vmatpush1.bf16.msra.mxu0 %v293
    %372 = vmatprep.subr.bf16.mxu0 0
    %373 = vmatpush1.bf16.msra.mxu0 %v294
    %374 = vmatprep.subr.bf16.mxu0 0
    %375 = vmatpush1.bf16.msra.mxu0 %v295
    %376 = vmatprep.subr.bf16.mxu0 0
    %377 = vmatpush1.bf16.msra.mxu0 %v296
    %378 = vmatprep.subr.bf16.mxu0 0
    %379 = vmatpush1.bf16.msra.mxu0 %v297
    %380 = vmatprep.subr.bf16.mxu0 0
    %381 = vmatpush1.bf16.msra.mxu0 %v298
    %382 = vmatprep.subr.bf16.mxu0 0
    %383 = vmatpush1.bf16.msra.mxu0 %v299
    %384 = vmatprep.subr.bf16.mxu0 0
    %385 = vmatpush1.bf16.msra.mxu0 %v300
    %386 = vmatprep.subr.bf16.mxu0 0
    %387 = vmatpush1.bf16.msra.mxu0 %v301
    %388 = vmatprep.subr.bf16.mxu0 0
    %389 = vmatpush1.bf16.msra.mxu0 %v302
    %390 = vmatprep.subr.bf16.mxu0 0
    %391 = vmatpush1.bf16.msra.mxu0 %v303
    %392 = vmatprep.subr.bf16.mxu0 0
    %393 = vmatpush1.bf16.msra.mxu0 %v304
    %394 = vmatprep.subr.bf16.mxu0 0
    %395 = vmatpush1.bf16.msra.mxu0 %v305
    %396 = vmatprep.subr.bf16.mxu0 0
    %397 = vmatpush1.bf16.msra.mxu0 %v306
    %398 = vmatprep.subr.bf16.mxu0 0
    %399 = vmatpush1.bf16.msra.mxu0 %v307
    %400 = vmatprep.mubr.bf16.mxu0 %v141
    %401 = vmatmul.mubr.bf16.gmra.mrb[0].mxu0 %v127
    %v402 = vpop.f32.mrb[0].mxu0
    %v403 = vadd.f32 0.0, %v402
    %v404 = vpop.f32.mrb[0].mxu0
    %v405 = vpop.f32.mrb[0].mxu0
    %v406 = vpop.f32.mrb[0].mxu0
    %407 = vdwg.mxu0
    %408 = vmatprep.subr.bf16.mxu0 0
    %409 = vmatpush1.bf16.msra.mxu0 %v308
    %410 = vmatprep.subr.bf16.mxu0 0
    %411 = vmatpush1.bf16.msra.mxu0 %v309
    %412 = vmatprep.subr.bf16.mxu0 0
    %413 = vmatpush1.bf16.msra.mxu0 %v310
    %414 = vmatprep.subr.bf16.mxu0 0
    %415 = vmatpush1.bf16.msra.mxu0 %v311
    %416 = vmatprep.subr.bf16.mxu0 0
    %417 = vmatpush1.bf16.msra.mxu0 %v312
    %418 = vmatprep.subr.bf16.mxu0 0
    %419 = vmatpush1.bf16.msra.mxu0 %v313
    %420 = vmatprep.subr.bf16.mxu0 0
    %421 = vmatpush1.bf16.msra.mxu0 %v314
    %422 = vmatprep.subr.bf16.mxu0 0
    %423 = vmatpush1.bf16.msra.mxu0 %v315
    %424 = vmatprep.subr.bf16.mxu0 0
    %425 = vmatpush1.bf16.msra.mxu0 %v316
    %426 = vmatprep.subr.bf16.mxu0 0
    %427 = vmatpush1.bf16.msra.mxu0 %v317
    %428 = vmatprep.subr.bf16.mxu0 0
    %429 = vmatpush1.bf16.msra.mxu0 %v318
    %430 = vmatprep.subr.bf16.mxu0 0
    %431 = vmatpush1.bf16.msra.mxu0 %v319
    %432 = vmatprep.subr.bf16.mxu0 0
    %433 = vmatpush1.bf16.msra.mxu0 %v320
    %434 = vmatprep.subr.bf16.mxu0 0
    %435 = vmatpush1.bf16.msra.mxu0 %v321
    %436 = vmatprep.subr.bf16.mxu0 0
    %437 = vmatpush1.bf16.msra.mxu0 %v322
    %438 = vmatprep.subr.bf16.mxu0 0
    %439 = vmatpush1.bf16.msra.mxu0 %v323
    %440 = vmatprep.mubr.bf16.mxu0 %v143
    %441 = vmatmul.mubr.bf16.gmra.mrb[0].mxu0 %v142
    %v442 = vpop.f32.mrb[0].mxu0
    %v443 = vadd.f32 %v403, %v442
    %v444 = vpop.f32.mrb[0].mxu0
    %v445 = vpop.f32.mrb[0].mxu0
    %v446 = vpop.f32.mrb[0].mxu0
    %447 = vdwg.mxu0
    %448 = vmatprep.subr.bf16.mxu0 0
    %449 = vmatpush1.bf16.msra.mxu0 %v324
    %450 = vmatprep.subr.bf16.mxu0 0
    %451 = vmatpush1.bf16.msra.mxu0 %v325
    %452 = vmatprep.subr.bf16.mxu0 0
    %453 = vmatpush1.bf16.msra.mxu0 %v326
    %454 = vmatprep.subr.bf16.mxu0 0
    %455 = vmatpush1.bf16.msra.mxu0 %v327
    %456 = vmatprep.subr.bf16.mxu0 0
    %457 = vmatpush1.bf16.msra.mxu0 0
    %458 = vmatprep.subr.bf16.mxu0 0
    %459 = vmatpush1.bf16.msra.mxu0 0
    %460 = vmatprep.subr.bf16.mxu0 0
    %461 = vmatpush1.bf16.msra.mxu0 0
    %462 = vmatprep.subr.bf16.mxu0 0
    %463 = vmatpush1.bf16.msra.mxu0 0
    %464 = vmatprep.subr.bf16.mxu0 0
    %465 = vmatpush1.bf16.msra.mxu0 0
    %466 = vmatprep.subr.bf16.mxu0 0
    %467 = vmatpush1.bf16.msra.mxu0 0
    %468 = vmatprep.subr.bf16.mxu0 0
    %469 = vmatpush1.bf16.msra.mxu0 0
    %470 = vmatprep.subr.bf16.mxu0 0
    %471 = vmatpush1.bf16.msra.mxu0 0
    %472 = vmatprep.subr.bf16.mxu0 0
    %473 = vmatpush1.bf16.msra.mxu0 0
    %474 = vmatprep.subr.bf16.mxu0 0
    %475 = vmatpush1.bf16.msra.mxu0 0
    %476 = vmatprep.subr.bf16.mxu0 0
    %477 = vmatpush1.bf16.msra.mxu0 0
    %478 = vmatprep.subr.bf16.mxu0 0
    %479 = vmatpush1.bf16.msra.mxu0 0
    %480 = vmatprep.mubr.bf16.mxu0 0
    %481 = vmatmul.mubr.bf16.gmra.mrb[0].mxu0 %v366
    %v482 = vpop.f32.mrb[0].mxu0
    %v483 = vadd.f32 %v443, %v482
    %v484 = vpop.f32.mrb[0].mxu0
    %v485 = vpop.f32.mrb[0].mxu0
    %v486 = vpop.f32.mrb[0].mxu0
    %487 = vdwg.mxu0
    %vm488 = vcmask 517120
    %v489 = vsel %vm488, %v483, 0.0
    %v490 = vrot.slane %v489, 4
    %v491 = vadd.f32 %v489, %v490
    %v492 = vrot.slane %v491, 2
    %v493 = vadd.f32 %v491, %v492
    %v494 = vrot.slane %v493, 1
    %v495 = vadd.f32 %v493, %v494
    %v496 = vmul.f32 %v495, 0.5
    %v497 = vmul.f32 %v483, %v483
    %v498 = vsel %vm488, %v497, 0.0
    %v499 = vrot.slane %v498, 4
    %v500 = vadd.f32 %v498, %v499
    %v501 = vrot.slane %v500, 2
    %v502 = vadd.f32 %v500, %v501
    %v503 = vrot.slane %v502, 1
    %v504 = vadd.f32 %v502, %v503
    %v505 = vmul.f32 %v504, 0.5
    %v506 = vmul.f32 %v496, %v496
    %v507 = vsub.f32 %v505, %v506
    %v508 = vmax.f32 %v507, 0.0
    %v509 = vld [vmem:[%s2] sm:$0x1]
    %v510 = vadd.f32 %v508, 1e-05
    %v511 = vrsqrt.pop %v510
    %v512 = vmul.f32 %v509, %v511
    %v513 = vld [vmem:[%s3] sm:$0x1]
    %v514 = vmul.f32 %v496, %v512
    %v515 = vsub.f32 %v513, %v514
    %v517 = vlaneseq
    %v518 = vshrl.u32 %v517, 7
    %v519 = vsub.s32 0, %v518
    %v520 = vrot.slane %v512, %v519
    %v522 = vmul.f32 %v483, %v520
    %v524 = vlaneseq
    %v525 = vshrl.u32 %v524, 7
    %v526 = vsub.s32 0, %v525
    %v527 = vrot.slane %v515, %v526
    %v529 = vadd.f32 %v522, %v527
    %v530 = vmax.f32 %v529, 0.0
    %v531 = vpack.c.bf16 %v530, %v530
    %v532 = vld [vmem:[%s4] sm:$0xff]
    %v533 = vld [vmem:[%s4 + $0x8] sm:$0xff]
    %v534 = vld [vmem:[%s4 + $0x10] sm:$0xff]
    %v535 = vld [vmem:[%s4 + $0x18] sm:$0xff]
    %v536 = vld [vmem:[%s4 + $0x20] sm:$0xff]
    %v537 = vld [vmem:[%s4 + $0x28] sm:$0xff]
    %v538 = vld [vmem:[%s4 + $0x30] sm:$0xff]
    %v539 = vld [vmem:[%s4 + $0x38] sm:$0xff]
    %v540 = vld [vmem:[%s4 + $0x40] sm:$0xff]
    %v541 = vld [vmem:[%s4 + $0x48] sm:$0xff]
    %v542 = vld [vmem:[%s4 + $0x50] sm:$0xff]
    %v543 = vld [vmem:[%s4 + $0x58] sm:$0xff]
    %v544 = vld [vmem:[%s4 + $0x60] sm:$0xff]
    %v545 = vld [vmem:[%s4 + $0x68] sm:$0xff]
    %v546 = vld [vmem:[%s4 + $0x70] sm:$0xff]
    %v547 = vld [vmem:[%s4 + $0x78] sm:$0xff]
    %v548 = vld [vmem:[%s5] sm:$0xf]
    %v550 = vlaneseq
    %v551 = vshrl.u32 %v550, 7
    %v552 = vsub.s32 0, %v551
    %v553 = vrot.slane %v548, %v552
    %v554 = vlaneseq
    %v555 = vshrl.u32 %v554, 7
    %v556 = vsub.s32 1, %v555
    %v557 = vrot.slane %v548, %v556
    %v558 = vlaneseq
    %v559 = vshrl.u32 %v558, 7
    %v560 = vsub.s32 2, %v559
    %v561 = vrot.slane %v548, %v560
    %v562 = vlaneseq
    %v563 = vshrl.u32 %v562, 7
    %v564 = vsub.s32 3, %v563
    %v565 = vrot.slane %v548, %v564
    %v586 = vunpack.c.l.b16 %v532
    %v587 = vunpack.c.h.b16 %v532
    %v588 = vunpack.c.l.b16 %v533
    %v589 = vunpack.c.h.b16 %v533
    %v590 = vunpack.c.l.b16 %v534
    %v591 = vunpack.c.h.b16 %v534
    %v592 = vunpack.c.l.b16 %v535
    %v593 = vunpack.c.h.b16 %v535
    %v594 = vunpack.c.l.b16 %v536
    %v595 = vunpack.c.h.b16 %v536
    %v596 = vunpack.c.l.b16 %v537
    %v597 = vunpack.c.h.b16 %v537
    %v598 = vunpack.c.l.b16 %v538
    %v599 = vunpack.c.h.b16 %v538
    %v600 = vunpack.c.l.b16 %v539
    %v601 = vunpack.c.h.b16 %v539
    %v602 = vunpack.c.l.b16 %v540
    %v603 = vunpack.c.h.b16 %v540
    %v604 = vunpack.c.l.b16 %v541
    %v605 = vunpack.c.h.b16 %v541
    %v606 = vunpack.c.l.b16 %v542
    %v607 = vunpack.c.h.b16 %v542
    %v608 = vunpack.c.l.b16 %v543
    %v609 = vunpack.c.h.b16 %v543
    %v610 = vunpack.c.l.b16 %v544
    %v611 = vunpack.c.h.b16 %v544
    %v612 = vunpack.c.l.b16 %v545
    %v613 = vunpack.c.h.b16 %v545
    %v614 = vunpack.c.l.b16 %v546
    %v615 = vunpack.c.h.b16 %v546
    %v616 = vunpack.c.l.b16 %v547
    %v617 = vunpack.c.h.b16 %v547
    %v618 = vpack.c.b16 %v590, %v586
    %v619 = vpack.c.b16 %v591, %v587
    %v620 = vpack.c.b16 %v592, %v588
    %v621 = vpack.c.b16 %v593, %v589
    %v622 = vpack.c.b16 %v598, %v594
    %v623 = vpack.c.b16 %v599, %v595
    %v624 = vpack.c.b16 %v600, %v596
    %v625 = vpack.c.b16 %v601, %v597
    %v626 = vpack.c.b16 %v606, %v602
    %v627 = vpack.c.b16 %v607, %v603
    %v628 = vpack.c.b16 %v608, %v604
    %v629 = vpack.c.b16 %v609, %v605
    %v630 = vpack.c.b16 %v614, %v610
    %v631 = vpack.c.b16 %v615, %v611
    %v632 = vpack.c.b16 %v616, %v612
    %v633 = vpack.c.b16 %v617, %v613
    %v651 = vsel %vm364, %v531, 0
    %653 = vmatprep.subr.bf16.mxu0 %v619
    %654 = vmatpush1.bf16.msra.mxu0 %v618
    %655 = vmatprep.subr.bf16.mxu0 %v623
    %656 = vmatpush1.bf16.msra.mxu0 %v622
    %657 = vmatprep.subr.bf16.mxu0 %v627
    %658 = vmatpush1.bf16.msra.mxu0 %v626
    %659 = vmatprep.subr.bf16.mxu0 %v631
    %660 = vmatpush1.bf16.msra.mxu0 %v630
    %661 = vmatprep.subr.bf16.mxu0 0
    %662 = vmatpush1.bf16.msra.mxu0 0
    %663 = vmatprep.subr.bf16.mxu0 0
    %664 = vmatpush1.bf16.msra.mxu0 0
    %665 = vmatprep.subr.bf16.mxu0 0
    %666 = vmatpush1.bf16.msra.mxu0 0
    %667 = vmatprep.subr.bf16.mxu0 0
    %668 = vmatpush1.bf16.msra.mxu0 0
    %669 = vmatprep.subr.bf16.mxu0 0
    %670 = vmatpush1.bf16.msra.mxu0 0
    %671 = vmatprep.subr.bf16.mxu0 0
    %672 = vmatpush1.bf16.msra.mxu0 0
    %673 = vmatprep.subr.bf16.mxu0 0
    %674 = vmatpush1.bf16.msra.mxu0 0
    %675 = vmatprep.subr.bf16.mxu0 0
    %676 = vmatpush1.bf16.msra.mxu0 0
    %677 = vmatprep.subr.bf16.mxu0 0
    %678 = vmatpush1.bf16.msra.mxu0 0
    %679 = vmatprep.subr.bf16.mxu0 0
    %680 = vmatpush1.bf16.msra.mxu0 0
    %681 = vmatprep.subr.bf16.mxu0 0
    %682 = vmatpush1.bf16.msra.mxu0 0
    %683 = vmatprep.subr.bf16.mxu0 0
    %684 = vmatpush1.bf16.msra.mxu0 0
    %685 = vmatprep.mubr.bf16.mxu0 0
    %686 = vmatmul.mubr.bf16.gmra.mrb[0].mxu0 %v651
    %v687 = vpop.f32.mrb[0].mxu0
    %v688 = vadd.f32 %v553, %v687
    %v689 = vpop.f32.mrb[0].mxu0
    %v690 = vadd.f32 %v557, %v689
    %v691 = vpop.f32.mrb[0].mxu0
    %v692 = vpop.f32.mrb[0].mxu0
    %693 = vdwg.mxu0
    %694 = vmatprep.subr.bf16.mxu0 %v621
    %695 = vmatpush1.bf16.msra.mxu0 %v620
    %696 = vmatprep.subr.bf16.mxu0 %v625
    %697 = vmatpush1.bf16.msra.mxu0 %v624
    %698 = vmatprep.subr.bf16.mxu0 %v629
    %699 = vmatpush1.bf16.msra.mxu0 %v628
    %700 = vmatprep.subr.bf16.mxu0 %v633
    %701 = vmatpush1.bf16.msra.mxu0 %v632
    %702 = vmatprep.subr.bf16.mxu0 0
    %703 = vmatpush1.bf16.msra.mxu0 0
    %704 = vmatprep.subr.bf16.mxu0 0
    %705 = vmatpush1.bf16.msra.mxu0 0
    %706 = vmatprep.subr.bf16.mxu0 0
    %707 = vmatpush1.bf16.msra.mxu0 0
    %708 = vmatprep.subr.bf16.mxu0 0
    %709 = vmatpush1.bf16.msra.mxu0 0
    %710 = vmatprep.subr.bf16.mxu0 0
    %711 = vmatpush1.bf16.msra.mxu0 0
    %712 = vmatprep.subr.bf16.mxu0 0
    %713 = vmatpush1.bf16.msra.mxu0 0
    %714 = vmatprep.subr.bf16.mxu0 0
    %715 = vmatpush1.bf16.msra.mxu0 0
    %716 = vmatprep.subr.bf16.mxu0 0
    %717 = vmatpush1.bf16.msra.mxu0 0
    %718 = vmatprep.subr.bf16.mxu0 0
    %719 = vmatpush1.bf16.msra.mxu0 0
    %720 = vmatprep.subr.bf16.mxu0 0
    %721 = vmatpush1.bf16.msra.mxu0 0
    %722 = vmatprep.subr.bf16.mxu0 0
    %723 = vmatpush1.bf16.msra.mxu0 0
    %724 = vmatprep.subr.bf16.mxu0 0
    %725 = vmatpush1.bf16.msra.mxu0 0
    %726 = vmatprep.mubr.bf16.mxu0 0
    %727 = vmatmul.mubr.bf16.gmra.mrb[0].mxu0 %v651
    %v728 = vpop.f32.mrb[0].mxu0
    %v729 = vadd.f32 %v561, %v728
    %v730 = vpop.f32.mrb[0].mxu0
    %v731 = vadd.f32 %v565, %v730
    %v732 = vpop.f32.mrb[0].mxu0
    %v733 = vpop.f32.mrb[0].mxu0
    %734 = vdwg.mxu0
    %v735 = vmax.f32 %v688, 0.0
    %v736 = vmax.f32 %v690, 0.0
    %v737 = vmax.f32 %v729, 0.0
    %v738 = vmax.f32 %v731, 0.0
    %v739 = vpack.c.bf16 %v735, %v735
    %v740 = vpack.c.bf16 %v736, %v736
    %v741 = vpack.c.bf16 %v737, %v737
    %v742 = vpack.c.bf16 %v738, %v738
    %v743 = vld [vmem:[%s6] sm:$0xf]
    %v744 = vld [vmem:[%s6 + $0x4] sm:$0xf]
    %v745 = vld [vmem:[%s6 + $0x8] sm:$0xf]
    %v746 = vld [vmem:[%s6 + $0xc] sm:$0xf]
    %v747 = vld [vmem:[%s6 + $0x10] sm:$0xf]
    %v748 = vld [vmem:[%s6 + $0x14] sm:$0xf]
    %v749 = vld [vmem:[%s6 + $0x18] sm:$0xf]
    %v750 = vld [vmem:[%s6 + $0x1c] sm:$0xf]
    %v751 = vld [vmem:[%s6 + $0x20] sm:$0xf]
    %v752 = vld [vmem:[%s6 + $0x24] sm:$0xf]
    %v753 = vld [vmem:[%s6 + $0x28] sm:$0xf]
    %v754 = vld [vmem:[%s6 + $0x2c] sm:$0xf]
    %v755 = vld [vmem:[%s6 + $0x30] sm:$0xf]
    %v756 = vld [vmem:[%s6 + $0x34] sm:$0xf]
    %v757 = vld [vmem:[%s6 + $0x38] sm:$0xf]
    %v758 = vld [vmem:[%s6 + $0x3c] sm:$0xf]
    %v759 = vld [vmem:[%s6 + $0x40] sm:$0xf]
    %v760 = vld [vmem:[%s6 + $0x44] sm:$0xf]
    %v761 = vld [vmem:[%s6 + $0x48] sm:$0xf]
    %v762 = vld [vmem:[%s6 + $0x4c] sm:$0xf]
    %v763 = vld [vmem:[%s6 + $0x50] sm:$0xf]
    %v764 = vld [vmem:[%s6 + $0x54] sm:$0xf]
    %v765 = vld [vmem:[%s6 + $0x58] sm:$0xf]
    %v766 = vld [vmem:[%s6 + $0x5c] sm:$0xf]
    %v767 = vld [vmem:[%s6 + $0x60] sm:$0xf]
    %v768 = vld [vmem:[%s6 + $0x64] sm:$0xf]
    %v769 = vld [vmem:[%s6 + $0x68] sm:$0xf]
    %v770 = vld [vmem:[%s6 + $0x6c] sm:$0xf]
    %v771 = vld [vmem:[%s6 + $0x70] sm:$0xf]
    %v772 = vld [vmem:[%s6 + $0x74] sm:$0xf]
    %v773 = vld [vmem:[%s6 + $0x78] sm:$0xf]
    %v774 = vld [vmem:[%s6 + $0x7c] sm:$0xf]
    %v775 = vld [vmem:[%s6 + $0x80] sm:$0xf]
    %v776 = vld [vmem:[%s6 + $0x84] sm:$0xf]
    %v777 = vld [vmem:[%s6 + $0x88] sm:$0xf]
    %v778 = vld [vmem:[%s6 + $0x8c] sm:$0xf]
    %v779 = vld [vmem:[%s6 + $0x90] sm:$0xf]
    %v780 = vld [vmem:[%s6 + $0x94] sm:$0xf]
    %v781 = vld [vmem:[%s6 + $0x98] sm:$0xf]
    %v782 = vld [vmem:[%s6 + $0x9c] sm:$0xf]
    %v783 = vld [vmem:[%s6 + $0xa0] sm:$0xf]
    %v784 = vld [vmem:[%s6 + $0xa4] sm:$0xf]
    %v785 = vld [vmem:[%s6 + $0xa8] sm:$0xf]
    %v786 = vld [vmem:[%s6 + $0xac] sm:$0xf]
    %v787 = vld [vmem:[%s6 + $0xb0] sm:$0xf]
    %v788 = vld [vmem:[%s6 + $0xb4] sm:$0xf]
    %v789 = vld [vmem:[%s6 + $0xb8] sm:$0xf]
    %v790 = vld [vmem:[%s6 + $0xbc] sm:$0xf]
    %v791 = vld [vmem:[%s6 + $0xc0] sm:$0xf]
    %v792 = vld [vmem:[%s6 + $0xc4] sm:$0xf]
    %v793 = vld [vmem:[%s6 + $0xc8] sm:$0xf]
    %v794 = vld [vmem:[%s6 + $0xcc] sm:$0xf]
    %v795 = vld [vmem:[%s6 + $0xd0] sm:$0xf]
    %v796 = vld [vmem:[%s6 + $0xd4] sm:$0xf]
    %v797 = vld [vmem:[%s6 + $0xd8] sm:$0xf]
    %v798 = vld [vmem:[%s6 + $0xdc] sm:$0xf]
    %v799 = vld [vmem:[%s6 + $0xe0] sm:$0xf]
    %v800 = vld [vmem:[%s6 + $0xe4] sm:$0xf]
    %v801 = vld [vmem:[%s6 + $0xe8] sm:$0xf]
    %v802 = vld [vmem:[%s6 + $0xec] sm:$0xf]
    %v803 = vld [vmem:[%s6 + $0xf0] sm:$0xf]
    %v804 = vld [vmem:[%s6 + $0xf4] sm:$0xf]
    %v805 = vld [vmem:[%s6 + $0xf8] sm:$0xf]
    %v806 = vld [vmem:[%s6 + $0xfc] sm:$0xf]
    %v807 = vld [vmem:[%s7] sm:$0x1]
    %v809 = vlaneseq
    %v810 = vshrl.u32 %v809, 7
    %v811 = vsub.s32 0, %v810
    %v812 = vrot.slane %v807, %v811
    %v878 = vunpack.c.l.b16 %v743
    %v879 = vunpack.c.l.b16 %v744
    %v880 = vunpack.c.l.b16 %v745
    %v881 = vunpack.c.l.b16 %v746
    %v882 = vunpack.c.l.b16 %v747
    %v883 = vunpack.c.l.b16 %v748
    %v884 = vunpack.c.l.b16 %v749
    %v885 = vunpack.c.l.b16 %v750
    %v886 = vunpack.c.l.b16 %v751
    %v887 = vunpack.c.l.b16 %v752
    %v888 = vunpack.c.l.b16 %v753
    %v889 = vunpack.c.l.b16 %v754
    %v890 = vunpack.c.l.b16 %v755
    %v891 = vunpack.c.l.b16 %v756
    %v892 = vunpack.c.l.b16 %v757
    %v893 = vunpack.c.l.b16 %v758
    %v894 = vunpack.c.l.b16 %v759
    %v895 = vunpack.c.l.b16 %v760
    %v896 = vunpack.c.l.b16 %v761
    %v897 = vunpack.c.l.b16 %v762
    %v898 = vunpack.c.l.b16 %v763
    %v899 = vunpack.c.l.b16 %v764
    %v900 = vunpack.c.l.b16 %v765
    %v901 = vunpack.c.l.b16 %v766
    %v902 = vunpack.c.l.b16 %v767
    %v903 = vunpack.c.l.b16 %v768
    %v904 = vunpack.c.l.b16 %v769
    %v905 = vunpack.c.l.b16 %v770
    %v906 = vunpack.c.l.b16 %v771
    %v907 = vunpack.c.l.b16 %v772
    %v908 = vunpack.c.l.b16 %v773
    %v909 = vunpack.c.l.b16 %v774
    %v910 = vunpack.c.l.b16 %v775
    %v911 = vunpack.c.l.b16 %v776
    %v912 = vunpack.c.l.b16 %v777
    %v913 = vunpack.c.l.b16 %v778
    %v914 = vunpack.c.l.b16 %v779
    %v915 = vunpack.c.l.b16 %v780
    %v916 = vunpack.c.l.b16 %v781
    %v917 = vunpack.c.l.b16 %v782
    %v918 = vunpack.c.l.b16 %v783
    %v919 = vunpack.c.l.b16 %v784
    %v920 = vunpack.c.l.b16 %v785
    %v921 = vunpack.c.l.b16 %v786
    %v922 = vunpack.c.l.b16 %v787
    %v923 = vunpack.c.l.b16 %v788
    %v924 = vunpack.c.l.b16 %v789
    %v925 = vunpack.c.l.b16 %v790
    %v926 = vunpack.c.l.b16 %v791
    %v927 = vunpack.c.l.b16 %v792
    %v928 = vunpack.c.l.b16 %v793
    %v929 = vunpack.c.l.b16 %v794
    %v930 = vunpack.c.l.b16 %v795
    %v931 = vunpack.c.l.b16 %v796
    %v932 = vunpack.c.l.b16 %v797
    %v933 = vunpack.c.l.b16 %v798
    %v934 = vunpack.c.l.b16 %v799
    %v935 = vunpack.c.l.b16 %v800
    %v936 = vunpack.c.l.b16 %v801
    %v937 = vunpack.c.l.b16 %v802
    %v938 = vunpack.c.l.b16 %v803
    %v939 = vunpack.c.l.b16 %v804
    %v940 = vunpack.c.l.b16 %v805
    %v941 = vunpack.c.l.b16 %v806
    %v942 = vpack.c.b16 %v879, %v878
    %v943 = vpack.c.b16 %v881, %v880
    %v944 = vpack.c.b16 %v883, %v882
    %v945 = vpack.c.b16 %v885, %v884
    %v946 = vpack.c.b16 %v887, %v886
    %v947 = vpack.c.b16 %v889, %v888
    %v948 = vpack.c.b16 %v891, %v890
    %v949 = vpack.c.b16 %v893, %v892
    %v950 = vpack.c.b16 %v895, %v894
    %v951 = vpack.c.b16 %v897, %v896
    %v952 = vpack.c.b16 %v899, %v898
    %v953 = vpack.c.b16 %v901, %v900
    %v954 = vpack.c.b16 %v903, %v902
    %v955 = vpack.c.b16 %v905, %v904
    %v956 = vpack.c.b16 %v907, %v906
    %v957 = vpack.c.b16 %v909, %v908
    %v958 = vpack.c.b16 %v911, %v910
    %v959 = vpack.c.b16 %v913, %v912
    %v960 = vpack.c.b16 %v915, %v914
    %v961 = vpack.c.b16 %v917, %v916
    %v962 = vpack.c.b16 %v919, %v918
    %v963 = vpack.c.b16 %v921, %v920
    %v964 = vpack.c.b16 %v923, %v922
    %v965 = vpack.c.b16 %v925, %v924
    %v966 = vpack.c.b16 %v927, %v926
    %v967 = vpack.c.b16 %v929, %v928
    %v968 = vpack.c.b16 %v931, %v930
    %v969 = vpack.c.b16 %v933, %v932
    %v970 = vpack.c.b16 %v935, %v934
    %v971 = vpack.c.b16 %v937, %v936
    %v972 = vpack.c.b16 %v939, %v938
    %v973 = vpack.c.b16 %v941, %v940
    %1006 = vmatprep.subr.bf16.mxu0 0
    %1007 = vmatpush1.bf16.msra.mxu0 %v942
    %1008 = vmatprep.subr.bf16.mxu0 0
    %1009 = vmatpush1.bf16.msra.mxu0 %v943
    %1010 = vmatprep.subr.bf16.mxu0 0
    %1011 = vmatpush1.bf16.msra.mxu0 %v944
    %1012 = vmatprep.subr.bf16.mxu0 0
    %1013 = vmatpush1.bf16.msra.mxu0 %v945
    %1014 = vmatprep.subr.bf16.mxu0 0
    %1015 = vmatpush1.bf16.msra.mxu0 %v946
    %1016 = vmatprep.subr.bf16.mxu0 0
    %1017 = vmatpush1.bf16.msra.mxu0 %v947
    %1018 = vmatprep.subr.bf16.mxu0 0
    %1019 = vmatpush1.bf16.msra.mxu0 %v948
    %1020 = vmatprep.subr.bf16.mxu0 0
    %1021 = vmatpush1.bf16.msra.mxu0 %v949
    %1022 = vmatprep.subr.bf16.mxu0 0
    %1023 = vmatpush1.bf16.msra.mxu0 %v950
    %1024 = vmatprep.subr.bf16.mxu0 0
    %1025 = vmatpush1.bf16.msra.mxu0 %v951
    %1026 = vmatprep.subr.bf16.mxu0 0
    %1027 = vmatpush1.bf16.msra.mxu0 %v952
    %1028 = vmatprep.subr.bf16.mxu0 0
    %1029 = vmatpush1.bf16.msra.mxu0 %v953
    %1030 = vmatprep.subr.bf16.mxu0 0
    %1031 = vmatpush1.bf16.msra.mxu0 %v954
    %1032 = vmatprep.subr.bf16.mxu0 0
    %1033 = vmatpush1.bf16.msra.mxu0 %v955
    %1034 = vmatprep.subr.bf16.mxu0 0
    %1035 = vmatpush1.bf16.msra.mxu0 %v956
    %1036 = vmatprep.subr.bf16.mxu0 0
    %1037 = vmatpush1.bf16.msra.mxu0 %v957
    %1038 = vmatprep.mubr.bf16.mxu0 %v740
    %1039 = vmatmul.mubr.bf16.gmra.mrb[0].mxu0 %v739
    %v1040 = vpop.f32.mrb[0].mxu0
    %v1041 = vadd.f32 %v812, %v1040
    %v1042 = vpop.f32.mrb[0].mxu0
    %v1043 = vpop.f32.mrb[0].mxu0
    %v1044 = vpop.f32.mrb[0].mxu0
    %1045 = vdwg.mxu0
    %1046 = vmatprep.subr.bf16.mxu0 0
    %1047 = vmatpush1.bf16.msra.mxu0 %v958
    %1048 = vmatprep.subr.bf16.mxu0 0
    %1049 = vmatpush1.bf16.msra.mxu0 %v959
    %1050 = vmatprep.subr.bf16.mxu0 0
    %1051 = vmatpush1.bf16.msra.mxu0 %v960
    %1052 = vmatprep.subr.bf16.mxu0 0
    %1053 = vmatpush1.bf16.msra.mxu0 %v961
    %1054 = vmatprep.subr.bf16.mxu0 0
    %1055 = vmatpush1.bf16.msra.mxu0 %v962
    %1056 = vmatprep.subr.bf16.mxu0 0
    %1057 = vmatpush1.bf16.msra.mxu0 %v963
    %1058 = vmatprep.subr.bf16.mxu0 0
    %1059 = vmatpush1.bf16.msra.mxu0 %v964
    %1060 = vmatprep.subr.bf16.mxu0 0
    %1061 = vmatpush1.bf16.msra.mxu0 %v965
    %1062 = vmatprep.subr.bf16.mxu0 0
    %1063 = vmatpush1.bf16.msra.mxu0 %v966
    %1064 = vmatprep.subr.bf16.mxu0 0
    %1065 = vmatpush1.bf16.msra.mxu0 %v967
    %1066 = vmatprep.subr.bf16.mxu0 0
    %1067 = vmatpush1.bf16.msra.mxu0 %v968
    %1068 = vmatprep.subr.bf16.mxu0 0
    %1069 = vmatpush1.bf16.msra.mxu0 %v969
    %1070 = vmatprep.subr.bf16.mxu0 0
    %1071 = vmatpush1.bf16.msra.mxu0 %v970
    %1072 = vmatprep.subr.bf16.mxu0 0
    %1073 = vmatpush1.bf16.msra.mxu0 %v971
    %1074 = vmatprep.subr.bf16.mxu0 0
    %1075 = vmatpush1.bf16.msra.mxu0 %v972
    %1076 = vmatprep.subr.bf16.mxu0 0
    %1077 = vmatpush1.bf16.msra.mxu0 %v973
    %1078 = vmatprep.mubr.bf16.mxu0 %v742
    %1079 = vmatmul.mubr.bf16.gmra.mrb[0].mxu0 %v741
    %v1080 = vpop.f32.mrb[0].mxu0
    %v1081 = vadd.f32 %v1041, %v1080
    %v1082 = vpop.f32.mrb[0].mxu0
    %v1083 = vpop.f32.mrb[0].mxu0
    %v1084 = vpop.f32.mrb[0].mxu0
    %1085 = vdwg.mxu0
    %vm1086 = vcmask 41984
    %1087 = vst.msk [vmem:[#allocation2] sm:$0x3] %vm1086, %v1081
    // Predicated region
    $region34: #{dqn_forward.5} parent=1 // pred_check
      _
    $region35: #{dqn_forward.5} parent=1 // pred_check_branch
      %1089 = sbr.rel (0) target = $region37
    $region36: #{dqn_forward.5} parent=1 // pred_region
      %s1091 = ssub.s32 32, 32
      %1092 = vsyncadd [#allocation3], %s1091
      %s1094 = sshll.u32 [#allocation2], 4
      %s1095 = int_to_ptr.vmem [resolvable:$true] %s1094
      %1097 = dma.vmem_to_hbm [thread:$0]  %s1095, 32, %s8, [#allocation3]
    $region37: #{dqn_forward.5} parent=1 // pred_fallthru
      _
    // Predicated region
    $region38: #{dqn_forward.5} parent=1 // pred_check
      _
    $region39: #{dqn_forward.5} parent=1 // pred_check_branch
      %1099 = sbr.rel (0) target = $region41
    $region40: #{dqn_forward.5} parent=1 // pred_region
      %1100 = dma.done [#allocation3], 32
    $region41: #{dqn_forward.5} parent=1 // pred_fallthru
      _
    %1101 = vsyncpa [#allocation3], 1

</llo_original>
